<compile_context>
chip_gen: v7x
topology: tpu7x:2x2x1
jax: 0.10.0
libtpu: 0.0.40
codegen_flags: <defaults>
</compile_context>

<pallas_src>
import jax
import jax.numpy as jnp
from jax.experimental import pallas as pl
from jax.experimental.pallas import tpu as pltpu

# --- model hyper-parameters (small, consistent with the module) -------------
LATENT_DIM = 32
IMG_SHAPE = (1, 16, 16)            # (C, H, W)
OUT_DIM = int(IMG_SHAPE[0] * IMG_SHAPE[1] * IMG_SHAPE[2])
BN_EPS = 0.8                       # nn.BatchNorm1d(out_feat, 0.8) -> eps = 0.8
LRELU_SLOPE = 0.2
HIDDEN = (128, 256, 512, 1024)

# Packed small-parameter layout (all widths are multiples of 128 -> every
# slice is lane-aligned in VMEM):
#   b1  : bias of Linear(latent,128)
#   b5  : bias of Linear(1024,OUT_DIM)
#   gK / beK : BatchNorm gamma / beta of block K (K = 2,3,4)
#   sK  : per-output-column int8 dequant scale of Linear K (K = 2,3,4,5)
_PACK_NAMES = ("b1", "b5", "g2", "be2", "s2", "g3", "be3", "s3",
               "g4", "be4", "s4", "s5")
_PACK_WIDTHS = (128, OUT_DIM, 256, 256, 256, 512, 512, 512,
                1024, 1024, 1024, OUT_DIM)
_PACK_OFFSETS = tuple(sum(_PACK_WIDTHS[:i]) for i in range(len(_PACK_WIDTHS)))
_PACK_TOTAL = sum(_PACK_WIDTHS)
_PACK_IDX = {n: i for i, n in enumerate(_PACK_NAMES)}


def _pslice(p, name):
    """Static, lane-aligned slice of the packed params (works on Ref or array)."""
    i = _PACK_IDX[name]
    off = _PACK_OFFSETS[i]
    return p[:, off:off + _PACK_WIDTHS[i]]


def _leaky_relu(x):
    # max(x, 0.2*x) == LeakyReLU(0.2) for slope in (0,1); one vmax per element.
    return jnp.maximum(x, LRELU_SLOPE * x)


def _bn_lrelu(x, gamma, beta):
    # training-mode BatchNorm1d (batch stats, biased variance) folded into one
    # FMA per element, followed by LeakyReLU(0.2).  All in f32.
    mean = jnp.mean(x, axis=0, keepdims=True)
    xc = x - mean
    var = jnp.mean(xc * xc, axis=0, keepdims=True)
    scale = jax.lax.rsqrt(var + BN_EPS) * gamma
    return _leaky_relu(xc * scale + beta)


def _mm(x_f32, w):
    # bf16 MXU operands (int8 weights are cast in-place), f32 accumulation.
    return jnp.dot(x_f32.astype(jnp.bfloat16), w.astype(jnp.bfloat16),
                   preferred_element_type=jnp.float32)


def generator_kernel(z_ref, w1_ref, w2_ref, w3_ref, w4_ref, w5_ref,
                     p_ref, out_ref):
    # NOTE: BN statistics are computed over the rows of this block.  The demo
    # wrapper uses a single group == full batch, matching PyTorch exactly.
    z = z_ref[...]

    # block(latent_dim, 128, normalize=False)          (w1 is bf16, no scale)
    h = _leaky_relu(_mm(z, w1_ref[...]) + _pslice(p_ref, "b1"))

    # block(128, 256)  -- linear bias dropped (cancelled by BN mean-subtract)
    h = _bn_lrelu(_mm(h, w2_ref[...]) * _pslice(p_ref, "s2"),
                  _pslice(p_ref, "g2"), _pslice(p_ref, "be2"))

    # block(256, 512)
    h = _bn_lrelu(_mm(h, w3_ref[...]) * _pslice(p_ref, "s3"),
                  _pslice(p_ref, "g3"), _pslice(p_ref, "be3"))

    # block(512, 1024)
    h = _bn_lrelu(_mm(h, w4_ref[...]) * _pslice(p_ref, "s4"),
                  _pslice(p_ref, "g4"), _pslice(p_ref, "be4"))

    # Linear(1024, prod(img_shape)) + Tanh
    h = _mm(h, w5_ref[...]) * _pslice(p_ref, "s5") + _pslice(p_ref, "b5")
    out_ref[...] = jnp.tanh(h)


def init_params(key):
    """Deterministic synthetic parameters.

    Returns (weights, packed_small):
      weights : [w1 (bf16), w2..w5 (int8, per-column symmetric quant)],
                each stored as (in, out)
      packed  : (1, _PACK_TOTAL) f32 = concat of _PACK_NAMES slices
    Biases of the Linears feeding BatchNorm (b2/b3/b4) are omitted: they are
    mathematically cancelled by train-mode BN mean subtraction.
    """
    dims = (LATENT_DIM,) + HIDDEN + (OUT_DIM,)
    weights = []
    small = {}
    for i in range(5):
        fan_in, fan_out = dims[i], dims[i + 1]
        key, kw, kb = jax.random.split(key, 3)
        bound = float(fan_in) ** -0.5
        w = jax.random.uniform(kw, (fan_in, fan_out), jnp.float32, -bound, bound)
        b = jax.random.uniform(kb, (1, fan_out), jnp.float32, -bound, bound)
        if i == 0:
            weights.append(w.astype(jnp.bfloat16))
            small["b1"] = b
        else:
            # int8 symmetric quantization, per output column.
            col_max = jnp.maximum(jnp.max(jnp.abs(w), axis=0, keepdims=True),
                                  1e-8)
            scale = col_max / 127.0
            wq = jnp.clip(jnp.round(w / scale), -127, 127).astype(jnp.int8)
            weights.append(wq)
            small[f"s{i + 1}"] = scale
            if i == 4:
                small["b5"] = b
            else:
                small[f"g{i + 1}"] = jnp.ones((1, fan_out), jnp.float32)   # gamma
                small[f"be{i + 1}"] = jnp.zeros((1, fan_out), jnp.float32)  # beta
    packed = jnp.concatenate([small[n] for n in _PACK_NAMES], axis=1)
    assert packed.shape == (1, _PACK_TOTAL), packed.shape
    return weights, packed


def generator_forward(z, weights, packed, *, group_size=None):
    """Run the generator.  group_size=None -> one group == full batch, which
    reproduces PyTorch full-batch BN exactly.  group_size < B shards the batch
    across grid steps (and v7x TensorCores) with per-group BN stats."""
    B = z.shape[0]
    if group_size is None or group_size >= B:
        group_size = B
    assert B % group_size == 0
    n_groups = B // group_size

    in_specs = [pl.BlockSpec((group_size, LATENT_DIM), lambda g: (g, 0))]
    # Weights + packed params: full blocks with constant index_map -> fetched
    # once and kept VMEM-resident across all grid steps.
    in_specs += [pl.BlockSpec(w.shape, lambda g: (0, 0)) for w in weights]
    in_specs += [pl.BlockSpec(packed.shape, lambda g: (0, 0))]
    out_spec = pl.BlockSpec((group_size, OUT_DIM), lambda g: (g, 0))

    out_flat = pl.pallas_call(
        generator_kernel,
        out_shape=jax.ShapeDtypeStruct((B, OUT_DIM), jnp.float32),
        grid=(n_groups,),
        in_specs=in_specs,
        out_specs=out_spec,
        compiler_params=pltpu.CompilerParams(
            dimension_semantics=("parallel",),
            vmem_limit_bytes=8 << 20),
    )(z, *weights, packed)
    # img.view(img.shape[0], *img_shape)  -> NCHW
    return out_flat.reshape(B, *IMG_SHAPE)


def generator_reference(z, weights, packed):
    """Plain-JAX mirror of the kernel math (for a tolerance check)."""
    h = _leaky_relu(_mm(z, weights[0]) + _pslice(packed, "b1"))
    h = _bn_lrelu(_mm(h, weights[1]) * _pslice(packed, "s2"),
                  _pslice(packed, "g2"), _pslice(packed, "be2"))
    h = _bn_lrelu(_mm(h, weights[2]) * _pslice(packed, "s3"),
                  _pslice(packed, "g3"), _pslice(packed, "be3"))
    h = _bn_lrelu(_mm(h, weights[3]) * _pslice(packed, "s4"),
                  _pslice(packed, "g4"), _pslice(packed, "be4"))
    h = jnp.tanh(_mm(h, weights[4]) * _pslice(packed, "s5")
                 + _pslice(packed, "b5"))
    return h.reshape(z.shape[0], *IMG_SHAPE)


if __name__ == "__main__":
    key = jax.random.PRNGKey(0)
    kz, kp = jax.random.split(key)

    B = 8
    z = jax.random.normal(kz, (B, LATENT_DIM), jnp.float32)
    weights, packed = init_params(kp)

    img = generator_forward(z, weights, packed)
    jax.block_until_ready(img)

    assert img.shape == (B,) + IMG_SHAPE, img.shape
    assert bool(jnp.all(jnp.isfinite(img)))

    ref = generator_reference(z, weights, packed)
    jax.block_until_ready(ref)
    assert bool(jnp.allclose(img, ref, atol=2e-2, rtol=2e-2))

    print("KERNEL_OK")
</pallas_src>

<mosaic_0001>
module attributes {stable_mosaic.version = 11 : i64} {
  func.func @generator_kernel(%arg0: i32, %arg1: memref<8x32xf32, #tpu.memory_space<vmem>>, %arg2: memref<32x128xbf16, #tpu.memory_space<vmem>>, %arg3: memref<128x256xi8, #tpu.memory_space<vmem>>, %arg4: memref<256x512xi8, #tpu.memory_space<vmem>>, %arg5: memref<512x1024xi8, #tpu.memory_space<vmem>>, %arg6: memref<1024x256xi8, #tpu.memory_space<vmem>>, %arg7: memref<1x6016xf32, #tpu.memory_space<vmem>>, %arg8: memref<8x256xf32, #tpu.memory_space<vmem>>) attributes {dimension_semantics = [#tpu.dimension_semantics<parallel>], iteration_bounds = array<i64: 1>, scalar_prefetch = 0 : i64, scratch_operands = 0 : i64, tpu.core_type = #tpu.core_type<tc>, window_params = [{transform_indices = @transform_0, window_bounds = array<i64: 8, 32>}, {pipeline_mode = #tpu.pipeline_mode<synchronous>, transform_indices = @transform_1, window_bounds = array<i64: 32, 128>}, {pipeline_mode = #tpu.pipeline_mode<synchronous>, transform_indices = @transform_2, window_bounds = array<i64: 128, 256>}, {pipeline_mode = #tpu.pipeline_mode<synchronous>, transform_indices = @transform_3, window_bounds = array<i64: 256, 512>}, {pipeline_mode = #tpu.pipeline_mode<synchronous>, transform_indices = @transform_4, window_bounds = array<i64: 512, 1024>}, {pipeline_mode = #tpu.pipeline_mode<synchronous>, transform_indices = @transform_5, window_bounds = array<i64: 1024, 256>}, {pipeline_mode = #tpu.pipeline_mode<synchronous>, transform_indices = @transform_6, window_bounds = array<i64: 1, 6016>}, {transform_indices = @transform_7, window_bounds = array<i64: 8, 256>}]} {
    %c0 = arith.constant 0 : index
    %c0_0 = arith.constant 0 : index
    %0 = vector.load %arg1[%c0, %c0_0] : memref<8x32xf32, #tpu.memory_space<vmem>>, vector<8x32xf32>
    %c0_1 = arith.constant 0 : index
    %c0_2 = arith.constant 0 : index
    %1 = vector.load %arg2[%c0_1, %c0_2] : memref<32x128xbf16, #tpu.memory_space<vmem>>, vector<32x128xbf16>
    %2 = arith.truncf %0 : vector<8x32xf32> to vector<8x32xbf16>
    %cst = arith.constant dense<0.000000e+00> : vector<8x128xf32>
    %3 = tpu.matmul %2, %1, %cst {dimension_numbers = #tpu.dot_dimension_numbers<[1], [0], [0], [1], [0, 0, 1, 1], [], []>} : vector<8x32xbf16>, vector<32x128xbf16>, vector<8x128xf32> -> vector<8x128xf32>
    %c0_3 = arith.constant 0 : index
    %c0_4 = arith.constant 0 : index
    %4 = vector.load %arg7[%c0_3, %c0_4] : memref<1x6016xf32, #tpu.memory_space<vmem>>, vector<1x128xf32>
    %5 = vector.broadcast %4 : vector<1x128xf32> to vector<8x128xf32>
    %6 = arith.addf %3, %5 : vector<8x128xf32>
    %cst_5 = arith.constant 2.000000e-01 : f32
    %7 = vector.broadcast %cst_5 : f32 to vector<8x128xf32>
    %8 = arith.mulf %7, %6 : vector<8x128xf32>
    %9 = arith.maximumf %6, %8 : vector<8x128xf32>
    %c0_6 = arith.constant 0 : index
    %c0_7 = arith.constant 0 : index
    %10 = vector.load %arg3[%c0_6, %c0_7] : memref<128x256xi8, #tpu.memory_space<vmem>>, vector<128x256xi8>
    %11 = arith.truncf %9 : vector<8x128xf32> to vector<8x128xbf16>
    %12 = arith.sitofp %10 : vector<128x256xi8> to vector<128x256xbf16>
    %cst_8 = arith.constant dense<0.000000e+00> : vector<8x256xf32>
    %13 = tpu.matmul %11, %12, %cst_8 {dimension_numbers = #tpu.dot_dimension_numbers<[1], [0], [0], [1], [0, 0, 1, 1], [], []>} : vector<8x128xbf16>, vector<128x256xbf16>, vector<8x256xf32> -> vector<8x256xf32>
    %c0_9 = arith.constant 0 : index
    %c896 = arith.constant 896 : index
    %14 = vector.load %arg7[%c0_9, %c896] : memref<1x6016xf32, #tpu.memory_space<vmem>>, vector<1x256xf32>
    %15 = vector.broadcast %14 : vector<1x256xf32> to vector<8x256xf32>
    %16 = arith.mulf %13, %15 : vector<8x256xf32>
    %c0_10 = arith.constant 0 : index
    %c384 = arith.constant 384 : index
    %17 = vector.load %arg7[%c0_10, %c384] : memref<1x6016xf32, #tpu.memory_space<vmem>>, vector<1x256xf32>
    %c0_11 = arith.constant 0 : index
    %c640 = arith.constant 640 : index
    %18 = vector.load %arg7[%c0_11, %c640] : memref<1x6016xf32, #tpu.memory_space<vmem>>, vector<1x256xf32>
    %cst_12 = arith.constant dense<0.000000e+00> : vector<256xf32>
    %19 = vector.multi_reduction <add>, %16, %cst_12 [0] : vector<8x256xf32> to vector<256xf32>
    %20 = vector.shape_cast %19 : vector<256xf32> to vector<1x256xf32>
    %cst_13 = arith.constant 8.000000e+00 : f32
    %21 = vector.broadcast %cst_13 : f32 to vector<1x256xf32>
    %22 = arith.divf %20, %21 : vector<1x256xf32>
    %23 = vector.broadcast %22 : vector<1x256xf32> to vector<8x256xf32>
    %24 = arith.subf %16, %23 : vector<8x256xf32>
    %25 = arith.mulf %24, %24 : vector<8x256xf32>
    %cst_14 = arith.constant dense<0.000000e+00> : vector<256xf32>
    %26 = vector.multi_reduction <add>, %25, %cst_14 [0] : vector<8x256xf32> to vector<256xf32>
    %27 = vector.shape_cast %26 : vector<256xf32> to vector<1x256xf32>
    %cst_15 = arith.constant 8.000000e+00 : f32
    %28 = vector.broadcast %cst_15 : f32 to vector<1x256xf32>
    %29 = arith.divf %27, %28 : vector<1x256xf32>
    %cst_16 = arith.constant 8.000000e-01 : f32
    %30 = vector.broadcast %cst_16 : f32 to vector<1x256xf32>
    %31 = arith.addf %29, %30 : vector<1x256xf32>
    %32 = math.rsqrt %31 : vector<1x256xf32>
    %33 = arith.mulf %32, %17 : vector<1x256xf32>
    %34 = vector.broadcast %33 : vector<1x256xf32> to vector<8x256xf32>
    %35 = arith.mulf %24, %34 : vector<8x256xf32>
    %36 = vector.broadcast %18 : vector<1x256xf32> to vector<8x256xf32>
    %37 = arith.addf %35, %36 : vector<8x256xf32>
    %cst_17 = arith.constant 2.000000e-01 : f32
    %38 = vector.broadcast %cst_17 : f32 to vector<8x256xf32>
    %39 = arith.mulf %38, %37 : vector<8x256xf32>
    %40 = arith.maximumf %37, %39 : vector<8x256xf32>
    %c0_18 = arith.constant 0 : index
    %c0_19 = arith.constant 0 : index
    %41 = vector.load %arg4[%c0_18, %c0_19] : memref<256x512xi8, #tpu.memory_space<vmem>>, vector<256x512xi8>
    %42 = arith.truncf %40 : vector<8x256xf32> to vector<8x256xbf16>
    %43 = arith.sitofp %41 : vector<256x512xi8> to vector<256x512xbf16>
    %cst_20 = arith.constant dense<0.000000e+00> : vector<8x512xf32>
    %44 = tpu.matmul %42, %43, %cst_20 {dimension_numbers = #tpu.dot_dimension_numbers<[1], [0], [0], [1], [0, 0, 1, 1], [], []>} : vector<8x256xbf16>, vector<256x512xbf16>, vector<8x512xf32> -> vector<8x512xf32>
    %c0_21 = arith.constant 0 : index
    %c2176 = arith.constant 2176 : index
    %45 = vector.load %arg7[%c0_21, %c2176] : memref<1x6016xf32, #tpu.memory_space<vmem>>, vector<1x512xf32>
    %46 = vector.broadcast %45 : vector<1x512xf32> to vector<8x512xf32>
    %47 = arith.mulf %44, %46 : vector<8x512xf32>
    %c0_22 = arith.constant 0 : index
    %c1152 = arith.constant 1152 : index
    %48 = vector.load %arg7[%c0_22, %c1152] : memref<1x6016xf32, #tpu.memory_space<vmem>>, vector<1x512xf32>
    %c0_23 = arith.constant 0 : index
    %c1664 = arith.constant 1664 : index
    %49 = vector.load %arg7[%c0_23, %c1664] : memref<1x6016xf32, #tpu.memory_space<vmem>>, vector<1x512xf32>
    %cst_24 = arith.constant dense<0.000000e+00> : vector<512xf32>
    %50 = vector.multi_reduction <add>, %47, %cst_24 [0] : vector<8x512xf32> to vector<512xf32>
    %51 = vector.shape_cast %50 : vector<512xf32> to vector<1x512xf32>
    %cst_25 = arith.constant 8.000000e+00 : f32
    %52 = vector.broadcast %cst_25 : f32 to vector<1x512xf32>
    %53 = arith.divf %51, %52 : vector<1x512xf32>
    %54 = vector.broadcast %53 : vector<1x512xf32> to vector<8x512xf32>
    %55 = arith.subf %47, %54 : vector<8x512xf32>
    %56 = arith.mulf %55, %55 : vector<8x512xf32>
    %cst_26 = arith.constant dense<0.000000e+00> : vector<512xf32>
    %57 = vector.multi_reduction <add>, %56, %cst_26 [0] : vector<8x512xf32> to vector<512xf32>
    %58 = vector.shape_cast %57 : vector<512xf32> to vector<1x512xf32>
    %cst_27 = arith.constant 8.000000e+00 : f32
    %59 = vector.broadcast %cst_27 : f32 to vector<1x512xf32>
    %60 = arith.divf %58, %59 : vector<1x512xf32>
    %cst_28 = arith.constant 8.000000e-01 : f32
    %61 = vector.broadcast %cst_28 : f32 to vector<1x512xf32>
    %62 = arith.addf %60, %61 : vector<1x512xf32>
    %63 = math.rsqrt %62 : vector<1x512xf32>
    %64 = arith.mulf %63, %48 : vector<1x512xf32>
    %65 = vector.broadcast %64 : vector<1x512xf32> to vector<8x512xf32>
    %66 = arith.mulf %55, %65 : vector<8x512xf32>
    %67 = vector.broadcast %49 : vector<1x512xf32> to vector<8x512xf32>
    %68 = arith.addf %66, %67 : vector<8x512xf32>
    %cst_29 = arith.constant 2.000000e-01 : f32
    %69 = vector.broadcast %cst_29 : f32 to vector<8x512xf32>
    %70 = arith.mulf %69, %68 : vector<8x512xf32>
    %71 = arith.maximumf %68, %70 : vector<8x512xf32>
    %c0_30 = arith.constant 0 : index
    %c0_31 = arith.constant 0 : index
    %72 = vector.load %arg5[%c0_30, %c0_31] : memref<512x1024xi8, #tpu.memory_space<vmem>>, vector<512x1024xi8>
    %73 = arith.truncf %71 : vector<8x512xf32> to vector<8x512xbf16>
    %74 = arith.sitofp %72 : vector<512x1024xi8> to vector<512x1024xbf16>
    %cst_32 = arith.constant dense<0.000000e+00> : vector<8x1024xf32>
    %75 = tpu.matmul %73, %74, %cst_32 {dimension_numbers = #tpu.dot_dimension_numbers<[1], [0], [0], [1], [0, 0, 1, 1], [], []>} : vector<8x512xbf16>, vector<512x1024xbf16>, vector<8x1024xf32> -> vector<8x1024xf32>
    %c0_33 = arith.constant 0 : index
    %c4736 = arith.constant 4736 : index
    %76 = vector.load %arg7[%c0_33, %c4736] : memref<1x6016xf32, #tpu.memory_space<vmem>>, vector<1x1024xf32>
    %77 = vector.broadcast %76 : vector<1x1024xf32> to vector<8x1024xf32>
    %78 = arith.mulf %75, %77 : vector<8x1024xf32>
    %c0_34 = arith.constant 0 : index
    %c2688 = arith.constant 2688 : index
    %79 = vector.load %arg7[%c0_34, %c2688] : memref<1x6016xf32, #tpu.memory_space<vmem>>, vector<1x1024xf32>
    %c0_35 = arith.constant 0 : index
    %c3712 = arith.constant 3712 : index
    %80 = vector.load %arg7[%c0_35, %c3712] : memref<1x6016xf32, #tpu.memory_space<vmem>>, vector<1x1024xf32>
    %cst_36 = arith.constant dense<0.000000e+00> : vector<1024xf32>
    %81 = vector.multi_reduction <add>, %78, %cst_36 [0] : vector<8x1024xf32> to vector<1024xf32>
    %82 = vector.shape_cast %81 : vector<1024xf32> to vector<1x1024xf32>
    %cst_37 = arith.constant 8.000000e+00 : f32
    %83 = vector.broadcast %cst_37 : f32 to vector<1x1024xf32>
    %84 = arith.divf %82, %83 : vector<1x1024xf32>
    %85 = vector.broadcast %84 : vector<1x1024xf32> to vector<8x1024xf32>
    %86 = arith.subf %78, %85 : vector<8x1024xf32>
    %87 = arith.mulf %86, %86 : vector<8x1024xf32>
    %cst_38 = arith.constant dense<0.000000e+00> : vector<1024xf32>
    %88 = vector.multi_reduction <add>, %87, %cst_38 [0] : vector<8x1024xf32> to vector<1024xf32>
    %89 = vector.shape_cast %88 : vector<1024xf32> to vector<1x1024xf32>
    %cst_39 = arith.constant 8.000000e+00 : f32
    %90 = vector.broadcast %cst_39 : f32 to vector<1x1024xf32>
    %91 = arith.divf %89, %90 : vector<1x1024xf32>
    %cst_40 = arith.constant 8.000000e-01 : f32
    %92 = vector.broadcast %cst_40 : f32 to vector<1x1024xf32>
    %93 = arith.addf %91, %92 : vector<1x1024xf32>
    %94 = math.rsqrt %93 : vector<1x1024xf32>
    %95 = arith.mulf %94, %79 : vector<1x1024xf32>
    %96 = vector.broadcast %95 : vector<1x1024xf32> to vector<8x1024xf32>
    %97 = arith.mulf %86, %96 : vector<8x1024xf32>
    %98 = vector.broadcast %80 : vector<1x1024xf32> to vector<8x1024xf32>
    %99 = arith.addf %97, %98 : vector<8x1024xf32>
    %cst_41 = arith.constant 2.000000e-01 : f32
    %100 = vector.broadcast %cst_41 : f32 to vector<8x1024xf32>
    %101 = arith.mulf %100, %99 : vector<8x1024xf32>
    %102 = arith.maximumf %99, %101 : vector<8x1024xf32>
    %c0_42 = arith.constant 0 : index
    %c0_43 = arith.constant 0 : index
    %103 = vector.load %arg6[%c0_42, %c0_43] : memref<1024x256xi8, #tpu.memory_space<vmem>>, vector<1024x256xi8>
    %104 = arith.truncf %102 : vector<8x1024xf32> to vector<8x1024xbf16>
    %105 = arith.sitofp %103 : vector<1024x256xi8> to vector<1024x256xbf16>
    %cst_44 = arith.constant dense<0.000000e+00> : vector<8x256xf32>
    %106 = tpu.matmul %104, %105, %cst_44 {dimension_numbers = #tpu.dot_dimension_numbers<[1], [0], [0], [1], [0, 0, 1, 1], [], []>} : vector<8x1024xbf16>, vector<1024x256xbf16>, vector<8x256xf32> -> vector<8x256xf32>
    %c0_45 = arith.constant 0 : index
    %c5760 = arith.constant 5760 : index
    %107 = vector.load %arg7[%c0_45, %c5760] : memref<1x6016xf32, #tpu.memory_space<vmem>>, vector<1x256xf32>
    %108 = vector.broadcast %107 : vector<1x256xf32> to vector<8x256xf32>
    %109 = arith.mulf %106, %108 : vector<8x256xf32>
    %c0_46 = arith.constant 0 : index
    %c128 = arith.constant 128 : index
    %110 = vector.load %arg7[%c0_46, %c128] : memref<1x6016xf32, #tpu.memory_space<vmem>>, vector<1x256xf32>
    %111 = vector.broadcast %110 : vector<1x256xf32> to vector<8x256xf32>
    %112 = arith.addf %109, %111 : vector<8x256xf32>
    %113 = math.tanh %112 : vector<8x256xf32>
    %c0_47 = arith.constant 0 : index
    %c0_48 = arith.constant 0 : index
    %114 = vector.load %arg8[%c0_47, %c0_48] : memref<8x256xf32, #tpu.memory_space<vmem>>, vector<8x256xf32>
    tpu.vector_store %arg8[%c0_47, %c0_48], %113 {strides = array<i32>} : memref<8x256xf32, #tpu.memory_space<vmem>>, vector<8x256xf32>,
    return
  }
  func.func @transform_0(%arg0: i32) -> (i32, i32) {
    %c0_i32 = arith.constant 0 : i32
    %c0_i32_0 = arith.constant 0 : i32
    return %arg0, %c0_i32 : i32, i32
  }
  func.func @transform_1(%arg0: i32) -> (i32, i32) {
    %c0_i32 = arith.constant 0 : i32
    %c0_i32_0 = arith.constant 0 : i32
    %c0_i32_1 = arith.constant 0 : i32
    return %c0_i32, %c0_i32_0 : i32, i32
  }
  func.func @transform_2(%arg0: i32) -> (i32, i32) {
    %c0_i32 = arith.constant 0 : i32
    %c0_i32_0 = arith.constant 0 : i32
    %c0_i32_1 = arith.constant 0 : i32
    return %c0_i32, %c0_i32_0 : i32, i32
  }
  func.func @transform_3(%arg0: i32) -> (i32, i32) {
    %c0_i32 = arith.constant 0 : i32
    %c0_i32_0 = arith.constant 0 : i32
    %c0_i32_1 = arith.constant 0 : i32
    return %c0_i32, %c0_i32_0 : i32, i32
  }
  func.func @transform_4(%arg0: i32) -> (i32, i32) {
    %c0_i32 = arith.constant 0 : i32
    %c0_i32_0 = arith.constant 0 : i32
    %c0_i32_1 = arith.constant 0 : i32
    return %c0_i32, %c0_i32_0 : i32, i32
  }
  func.func @transform_5(%arg0: i32) -> (i32, i32) {
    %c0_i32 = arith.constant 0 : i32
    %c0_i32_0 = arith.constant 0 : i32
    %c0_i32_1 = arith.constant 0 : i32
    return %c0_i32, %c0_i32_0 : i32, i32
  }
  func.func @transform_6(%arg0: i32) -> (i32, i32) {
    %c0_i32 = arith.constant 0 : i32
    %c0_i32_0 = arith.constant 0 : i32
    %c0_i32_1 = arith.constant 0 : i32
    return %c0_i32, %c0_i32_0 : i32, i32
  }
  func.func @transform_7(%arg0: i32) -> (i32, i32) {
    %c0_i32 = arith.constant 0 : i32
    %c0_i32_0 = arith.constant 0 : i32
    return %arg0, %c0_i32 : i32, i32
  }
}

</mosaic_0001>

<llo_original>
// kernel: tpu_custom_call.1
$region0: #{tpu_custom_call.1}
  #allocation0 [shape = 'u32[]', space=smem, size = 0x4, offset = 0x4, fixed_abs, tag = 'smem constant byte address 0x4 - core index']
  #allocation1 [shape = 'u32[144,128]{1,0:T(1,128)}', space=vmem, size = 0x12000, scoped, tag = 'internal scratch']
  %s0 = inlined_call_operand.hbm [shape: f32[8,32], index: 0, kind: input, shape index: {}]
  %s1 = inlined_call_operand.hbm [shape: bf16[32,128], index: 1, kind: input, shape index: {}]
  %s2 = inlined_call_operand.hbm [shape: s8[128,256], index: 2, kind: input, shape index: {}]
  %s3 = inlined_call_operand.hbm [shape: s8[256,512], index: 3, kind: input, shape index: {}]
  %s4 = inlined_call_operand.hbm [shape: s8[512,1024], index: 4, kind: input, shape index: {}]
  %s5 = inlined_call_operand.hbm [shape: s8[1024,256], index: 5, kind: input, shape index: {}]
  %s6 = inlined_call_operand.hbm [shape: f32[1,6016], index: 6, kind: input, shape index: {}]
  %s7 = inlined_call_operand.hbm [shape: f32[8,256], index: 7, kind: output, shape index: {}]
  %s8 = sld [smem:[#allocation0]]
  $region66: #{tpu_custom_call.1} parent=0
    _
  %s10 = ssub.s32 1, %s8
  %s11 = scalar_select 0, %s10, %s8
  $region1: #{tpu_custom_call.1} parent=0
    #allocation2 [shape = 'u8[4096]{0}', space=vmem, size = 0x1000, scoped, tag = 'input window, operand 0, single buffered']
    #allocation3 [shape = 's32[1]{0}', space=sflag, size = 0x4, scoped, tag = 'scoped memory for tpu_custom_call.1']
    #allocation4 [shape = 's32[1]{0}', space=sflag, size = 0x4, scoped, tag = 'scoped memory for tpu_custom_call.1']
    #allocation5 [shape = 'u8[8192]{0}', space=vmem, size = 0x2000, scoped, tag = 'input window, operand 1, single buffered']
    #allocation6 [shape = 's32[1]{0}', space=sflag, size = 0x4, scoped, tag = 'scoped memory for tpu_custom_call.1']
    #allocation7 [shape = 'u8[32768]{0}', space=vmem, size = 0x8000, scoped, tag = 'input window, operand 2, single buffered']
    #allocation8 [shape = 'u8[131072]{0}', space=vmem, size = 0x20000, scoped, tag = 'input window, operand 3, single buffered']
    #allocation9 [shape = 's32[1]{0}', space=sflag, size = 0x4, scoped, tag = 'scoped memory for tpu_custom_call.1']
    #allocation10 [shape = 'u8[524288]{0}', space=vmem, size = 0x80000, scoped, tag = 'input window, operand 4, single buffered']
    #allocation11 [shape = 'u8[262144]{0}', space=vmem, size = 0x40000, scoped, tag = 'input window, operand 5, single buffered']
    #allocation12 [shape = 's32[1]{0}', space=sflag, size = 0x4, scoped, tag = 'scoped memory for tpu_custom_call.1']
    #allocation13 [shape = 'u8[24064]{0}', space=vmem, size = 0x6000, scoped, tag = 'input window, operand 6, single buffered']
    #allocation14 [shape = 'u8[8192]{0}', space=vmem, size = 0x2000, scoped, tag = 'output window, operand 0, single buffered']
    %12 = vsyncpa [#allocation3], 0
    %13 = vsyncpa [#allocation6], 0
    %14 = vsyncpa [#allocation9], 0
    %15 = vsyncpa [#allocation12], 0
    %16 = vsyncpa [#allocation4], 0
    // Predicated region
    $region2: #{tpu_custom_call.1} parent=1 // pred_check
      _
    $region3: #{tpu_custom_call.1} parent=1 // pred_check_branch
      %18 = sbr.rel (0) target = $region5
    $region4: #{tpu_custom_call.1} parent=1 // pred_region
      %s20 = ssub.s32 128, 128
      %21 = vsyncadd [#allocation3], %s20
      %s23 = sshll.u32 [#allocation2], 4
      %s24 = int_to_ptr.vmem [resolvable:$true] %s23
      %26 = dma.hbm_to_vmem [thread:$0]  %s0, 128, %s24, [#allocation3]
    $region5: #{tpu_custom_call.1} parent=1 // pred_fallthru
      _
    // Predicated region
    $region6: #{tpu_custom_call.1} parent=1 // pred_check
      _
    $region7: #{tpu_custom_call.1} parent=1 // pred_check_branch
      %28 = sbr.rel (0) target = $region9
    $region8: #{tpu_custom_call.1} parent=1 // pred_region
      %s30 = ssub.s32 256, 256
      %31 = vsyncadd [#allocation6], %s30
      %s32 = sshll.u32 [#allocation5], 4
      %s33 = int_to_ptr.vmem [resolvable:$true] %s32
      %38 = dma.hbm_to_vmem [thread:$0]  %s1, 256, %s33, [#allocation6], 64, 64, 4
    $region9: #{tpu_custom_call.1} parent=1 // pred_fallthru
      _
    // Predicated region
    $region10: #{tpu_custom_call.1} parent=1 // pred_check
      _
    $region11: #{tpu_custom_call.1} parent=1 // pred_check_branch
      %40 = sbr.rel (0) target = $region13
    $region12: #{tpu_custom_call.1} parent=1 // pred_region
      %s42 = ssub.s32 1024, 1024
      %43 = vsyncadd [#allocation6], %s42
      %s44 = sshll.u32 [#allocation7], 4
      %s45 = int_to_ptr.vmem [resolvable:$true] %s44
      %50 = dma.hbm_to_vmem [thread:$0]  %s2, 1024, %s45, [#allocation6], 256, 256, 16
    $region13: #{tpu_custom_call.1} parent=1 // pred_fallthru
      _
    // Predicated region
    $region14: #{tpu_custom_call.1} parent=1 // pred_check
      _
    $region15: #{tpu_custom_call.1} parent=1 // pred_check_branch
      %52 = sbr.rel (0) target = $region17
    $region16: #{tpu_custom_call.1} parent=1 // pred_region
      %s54 = ssub.s32 4096, 4096
      %55 = vsyncadd [#allocation9], %s54
      %s56 = sshll.u32 [#allocation8], 4
      %s57 = int_to_ptr.vmem [resolvable:$true] %s56
      %62 = dma.hbm_to_vmem [thread:$0]  %s3, 4096, %s57, [#allocation9], 512, 512, 32
    $region17: #{tpu_custom_call.1} parent=1 // pred_fallthru
      _
    // Predicated region
    $region18: #{tpu_custom_call.1} parent=1 // pred_check
      _
    $region19: #{tpu_custom_call.1} parent=1 // pred_check_branch
      %64 = sbr.rel (0) target = $region21
    $region20: #{tpu_custom_call.1} parent=1 // pred_region
      %s66 = ssub.s32 16384, 16384
      %67 = vsyncadd [#allocation9], %s66
      %s68 = sshll.u32 [#allocation10], 4
      %s69 = int_to_ptr.vmem [resolvable:$true] %s68
      %74 = dma.hbm_to_vmem [thread:$0]  %s4, 16384, %s69, [#allocation9], 1024, 1024, 64
    $region21: #{tpu_custom_call.1} parent=1 // pred_fallthru
      _
    // Predicated region
    $region22: #{tpu_custom_call.1} parent=1 // pred_check
      _
    $region23: #{tpu_custom_call.1} parent=1 // pred_check_branch
      %76 = sbr.rel (0) target = $region25
    $region24: #{tpu_custom_call.1} parent=1 // pred_region
      %s78 = ssub.s32 8192, 8192
      %79 = vsyncadd [#allocation12], %s78
      %s80 = sshll.u32 [#allocation11], 4
      %s81 = int_to_ptr.vmem [resolvable:$true] %s80
      %86 = dma.hbm_to_vmem [thread:$0]  %s5, 8192, %s81, [#allocation12], 256, 256, 16
    $region25: #{tpu_custom_call.1} parent=1 // pred_fallthru
      _
    // Predicated region
    $region26: #{tpu_custom_call.1} parent=1 // pred_check
      _
    $region27: #{tpu_custom_call.1} parent=1 // pred_check_branch
      %88 = sbr.rel (0) target = $region29
    $region28: #{tpu_custom_call.1} parent=1 // pred_region
      %s90 = ssub.s32 752, 752
      %91 = vsyncadd [#allocation12], %s90
      %s93 = sshll.u32 [#allocation13], 4
      %s94 = int_to_ptr.vmem [resolvable:$true] %s93
      %96 = dma.hbm_to_vmem [thread:$0]  %s6, 752, %s94, [#allocation12]
    $region29: #{tpu_custom_call.1} parent=1 // pred_fallthru
      _
    // Predicated region
    $region30: #{tpu_custom_call.1} parent=1 // pred_check
      _
    $region31: #{tpu_custom_call.1} parent=1 // pred_check_branch
      %98 = sbr.rel (0) target = $region33
    $region32: #{tpu_custom_call.1} parent=1 // pred_region
      %99 = dma.done [#allocation3], 128
    $region33: #{tpu_custom_call.1} parent=1 // pred_fallthru
      _
    // Predicated region
    $region34: #{tpu_custom_call.1} parent=1 // pred_check
      _
    $region35: #{tpu_custom_call.1} parent=1 // pred_check_branch
      %101 = sbr.rel (0) target = $region37
    $region36: #{tpu_custom_call.1} parent=1 // pred_region
      %102 = dma.done [#allocation6], 256
    $region37: #{tpu_custom_call.1} parent=1 // pred_fallthru
      _
    // Predicated region
    $region38: #{tpu_custom_call.1} parent=1 // pred_check
      _
    $region39: #{tpu_custom_call.1} parent=1 // pred_check_branch
      %104 = sbr.rel (0) target = $region41
    $region40: #{tpu_custom_call.1} parent=1 // pred_region
      %105 = dma.done [#allocation6], 1024
    $region41: #{tpu_custom_call.1} parent=1 // pred_fallthru
      _
    // Predicated region
    $region42: #{tpu_custom_call.1} parent=1 // pred_check
      _
    $region43: #{tpu_custom_call.1} parent=1 // pred_check_branch
      %107 = sbr.rel (0) target = $region45
    $region44: #{tpu_custom_call.1} parent=1 // pred_region
      %108 = dma.done [#allocation9], 4096
    $region45: #{tpu_custom_call.1} parent=1 // pred_fallthru
      _
    // Predicated region
    $region46: #{tpu_custom_call.1} parent=1 // pred_check
      _
    $region47: #{tpu_custom_call.1} parent=1 // pred_check_branch
      %110 = sbr.rel (0) target = $region49
    $region48: #{tpu_custom_call.1} parent=1 // pred_region
      %111 = dma.done [#allocation9], 16384
    $region49: #{tpu_custom_call.1} parent=1 // pred_fallthru
      _
    // Predicated region
    $region50: #{tpu_custom_call.1} parent=1 // pred_check
      _
    $region51: #{tpu_custom_call.1} parent=1 // pred_check_branch
      %113 = sbr.rel (0) target = $region53
    $region52: #{tpu_custom_call.1} parent=1 // pred_region
      %114 = dma.done [#allocation12], 8192
    $region53: #{tpu_custom_call.1} parent=1 // pred_fallthru
      _
    // Predicated region
    $region54: #{tpu_custom_call.1} parent=1 // pred_check
      _
    $region55: #{tpu_custom_call.1} parent=1 // pred_check_branch
      %116 = sbr.rel (0) target = $region57
    $region56: #{tpu_custom_call.1} parent=1 // pred_region
      %117 = dma.done [#allocation12], 752
    $region57: #{tpu_custom_call.1} parent=1 // pred_fallthru
      _
    %v119 = vld [vmem:[#allocation2] sm:$0xff]
    %v120 = vld [vmem:[#allocation5] sm:$0xf]
    %v121 = vld [vmem:[#allocation5 + $0x4] sm:$0xf]
    %v122 = vld [vmem:[#allocation5 + $0x8] sm:$0xf]
    %v123 = vld [vmem:[#allocation5 + $0xc] sm:$0xf]
    %v124 = vpack.c.bf16 %v119, %v119
    %v125 = vld [vmem:[#allocation13] sm:$0x1]
    %v127 = vlaneseq
    %v128 = vshrl.u32 %v127, 7
    %v129 = vsub.s32 0, %v128
    %v130 = vrot.slane %v125, %v129
    %v136 = vunpack.c.l.b16 %v120
    %v137 = vunpack.c.l.b16 %v121
    %v138 = vunpack.c.l.b16 %v122
    %v139 = vunpack.c.l.b16 %v123
    %v140 = vpack.c.b16 %v137, %v136
    %v141 = vpack.c.b16 %v139, %v138
    %vm144 = vcmask 261120
    %v146 = vsel %vm144, %v124, 0
    %148 = vmatprep.subr.bf16.mxu0 0
    %149 = vmatpush1.bf16.msra.mxu0 %v140
    %150 = vmatprep.subr.bf16.mxu0 0
    %151 = vmatpush1.bf16.msra.mxu0 %v141
    %152 = vmatprep.subr.bf16.mxu0 0
    %153 = vmatpush1.bf16.msra.mxu0 0
    %154 = vmatprep.subr.bf16.mxu0 0
    %155 = vmatpush1.bf16.msra.mxu0 0
    %156 = vmatprep.subr.bf16.mxu0 0
    %157 = vmatpush1.bf16.msra.mxu0 0
    %158 = vmatprep.subr.bf16.mxu0 0
    %159 = vmatpush1.bf16.msra.mxu0 0
    %160 = vmatprep.subr.bf16.mxu0 0
    %161 = vmatpush1.bf16.msra.mxu0 0
    %162 = vmatprep.subr.bf16.mxu0 0
    %163 = vmatpush1.bf16.msra.mxu0 0
    %164 = vmatprep.subr.bf16.mxu0 0
    %165 = vmatpush1.bf16.msra.mxu0 0
    %166 = vmatprep.subr.bf16.mxu0 0
    %167 = vmatpush1.bf16.msra.mxu0 0
    %168 = vmatprep.subr.bf16.mxu0 0
    %169 = vmatpush1.bf16.msra.mxu0 0
    %170 = vmatprep.subr.bf16.mxu0 0
    %171 = vmatpush1.bf16.msra.mxu0 0
    %172 = vmatprep.subr.bf16.mxu0 0
    %173 = vmatpush1.bf16.msra.mxu0 0
    %174 = vmatprep.subr.bf16.mxu0 0
    %175 = vmatpush1.bf16.msra.mxu0 0
    %176 = vmatprep.subr.bf16.mxu0 0
    %177 = vmatpush1.bf16.msra.mxu0 0
    %178 = vmatprep.subr.bf16.mxu0 0
    %179 = vmatpush1.bf16.msra.mxu0 0
    %180 = vmatprep.mubr.bf16.mxu0 0
    %181 = vmatmul.mubr.bf16.gmra.mrb[0].mxu0 %v146
    %v182 = vpop.f32.mrb[0].mxu0
    %v183 = vadd.f32 %v130, %v182
    %v184 = vpop.f32.mrb[0].mxu0
    %v185 = vpop.f32.mrb[0].mxu0
    %v186 = vpop.f32.mrb[0].mxu0
    %187 = vdwg.mxu0
    %v188 = vmul.f32 %v183, 0.2
    %v189 = vmax.f32 %v183, %v188
    %v190 = vld [vmem:[#allocation7] sm:$0xff]
    %v191 = vld [vmem:[#allocation7 + $0x8] sm:$0xff]
    %v192 = vld [vmem:[#allocation7 + $0x10] sm:$0xff]
    %v193 = vld [vmem:[#allocation7 + $0x18] sm:$0xff]
    %v194 = vld [vmem:[#allocation7 + $0x20] sm:$0xff]
    %v195 = vld [vmem:[#allocation7 + $0x28] sm:$0xff]
    %v196 = vld [vmem:[#allocation7 + $0x30] sm:$0xff]
    %v197 = vld [vmem:[#allocation7 + $0x38] sm:$0xff]
    %v198 = vpack.c.bf16 %v189, %v189
    %v199 = vunpack.c.l.s8.bf16 %v190
    %v200 = vunpack.c.l.s8.bf16 %v191
    %v201 = vunpack.c.h.s8.bf16 %v190
    %v202 = vunpack.c.h.s8.bf16 %v191
    %v203 = vunpack.c.l.s8.bf16 %v192
    %v204 = vunpack.c.l.s8.bf16 %v193
    %v205 = vunpack.c.h.s8.bf16 %v192
    %v206 = vunpack.c.h.s8.bf16 %v193
    %v207 = vunpack.c.l.s8.bf16 %v194
    %v208 = vunpack.c.l.s8.bf16 %v195
    %v209 = vunpack.c.h.s8.bf16 %v194
    %v210 = vunpack.c.h.s8.bf16 %v195
    %v211 = vunpack.c.l.s8.bf16 %v196
    %v212 = vunpack.c.l.s8.bf16 %v197
    %v213 = vunpack.c.h.s8.bf16 %v196
    %v214 = vunpack.c.h.s8.bf16 %v197
    %215 = vmatprep.subr.bf16.mxu0 %v200
    %216 = vmatpush1.bf16.msra.mxu0 %v199
    %217 = vmatprep.subr.bf16.mxu0 %v202
    %218 = vmatpush1.bf16.msra.mxu0 %v201
    %219 = vmatprep.subr.bf16.mxu0 %v204
    %220 = vmatpush1.bf16.msra.mxu0 %v203
    %221 = vmatprep.subr.bf16.mxu0 %v206
    %222 = vmatpush1.bf16.msra.mxu0 %v205
    %223 = vmatprep.subr.bf16.mxu0 %v208
    %224 = vmatpush1.bf16.msra.mxu0 %v207
    %225 = vmatprep.subr.bf16.mxu0 %v210
    %226 = vmatpush1.bf16.msra.mxu0 %v209
    %227 = vmatprep.subr.bf16.mxu0 %v212
    %228 = vmatpush1.bf16.msra.mxu0 %v211
    %229 = vmatprep.subr.bf16.mxu0 %v214
    %230 = vmatpush1.bf16.msra.mxu0 %v213
    %231 = vmatprep.subr.bf16.mxu0 0
    %232 = vmatpush1.bf16.msra.mxu0 0
    %233 = vmatprep.subr.bf16.mxu0 0
    %234 = vmatpush1.bf16.msra.mxu0 0
    %235 = vmatprep.subr.bf16.mxu0 0
    %236 = vmatpush1.bf16.msra.mxu0 0
    %237 = vmatprep.subr.bf16.mxu0 0
    %238 = vmatpush1.bf16.msra.mxu0 0
    %239 = vmatprep.subr.bf16.mxu0 0
    %240 = vmatpush1.bf16.msra.mxu0 0
    %241 = vmatprep.subr.bf16.mxu0 0
    %242 = vmatpush1.bf16.msra.mxu0 0
    %243 = vmatprep.subr.bf16.mxu0 0
    %244 = vmatpush1.bf16.msra.mxu0 0
    %245 = vmatprep.subr.bf16.mxu0 0
    %246 = vmatpush1.bf16.msra.mxu0 0
    %247 = vmatprep.mubr.bf16.mxu0 0
    %248 = vmatmul.mubr.bf16.gmra.mrb[0].mxu0 %v198
    %v249 = vpop.f32.mrb[0].mxu0
    %v250 = vadd.f32 0.0, %v249
    %v251 = vpop.f32.mrb[0].mxu0
    %v252 = vadd.f32 0.0, %v251
    %v253 = vpop.f32.mrb[0].mxu0
    %v254 = vpop.f32.mrb[0].mxu0
    %255 = vdwg.mxu0
    %v256 = vld [vmem:[#allocation13 + $0x7] sm:$0x3]
    %v258 = vlaneseq
    %v259 = vshrl.u32 %v258, 7
    %v260 = vsub.s32 0, %v259
    %v261 = vrot.slane %v256, %v260
    %v262 = vlaneseq
    %v263 = vshrl.u32 %v262, 7
    %v264 = vsub.s32 1, %v263
    %v265 = vrot.slane %v256, %v264
    %v268 = vmul.f32 %v250, %v261
    %v269 = vmul.f32 %v252, %v265
    %v270 = vld [vmem:[#allocation13 + $0x3] sm:$0x3]
    %v271 = vld [vmem:[#allocation13 + $0x5] sm:$0x3]
    %v272 = vrot.slane %v268, 4
    %v273 = vadd.f32 %v268, %v272
    %v274 = vrot.slane %v273, 2
    %v275 = vadd.f32 %v273, %v274
    %v276 = vrot.slane %v275, 1
    %v277 = vadd.f32 %v275, %v276
    %v278 = vrot.slane %v269, 4
    %v279 = vadd.f32 %v269, %v278
    %v280 = vrot.slane %v279, 2
    %v281 = vadd.f32 %v279, %v280
    %v282 = vrot.slane %v281, 1
    %v283 = vadd.f32 %v281, %v282
    %v284 = vrcp.pop 8.0
    %v285 = vmul.f32 %v277, %v284
    %v286 = vmul.f32 %v283, %v284
    %v287 = vsub.f32 %v268, %v285
    %v288 = vsub.f32 %v269, %v286
    %v289 = vmul.f32 %v287, %v287
    %v290 = vmul.f32 %v288, %v288
    %v291 = vrot.slane %v289, 4
    %v292 = vadd.f32 %v289, %v291
    %v293 = vrot.slane %v292, 2
    %v294 = vadd.f32 %v292, %v293
    %v295 = vrot.slane %v294, 1
    %v296 = vadd.f32 %v294, %v295
    %v297 = vrot.slane %v290, 4
    %v298 = vadd.f32 %v290, %v297
    %v299 = vrot.slane %v298, 2
    %v300 = vadd.f32 %v298, %v299
    %v301 = vrot.slane %v300, 1
    %v302 = vadd.f32 %v300, %v301
    %v303 = vmul.f32 %v296, %v284
    %v304 = vmul.f32 %v302, %v284
    %v305 = vadd.f32 %v303, 0.8
    %v306 = vadd.f32 %v304, 0.8
    %v307 = vrsqrt.pop %v305
    %v308 = vrsqrt.pop %v306
    %v310 = vlaneseq
    %v311 = vshrl.u32 %v310, 7
    %v312 = vsub.s32 0, %v311
    %v313 = vrot.slane %v270, %v312
    %v314 = vlaneseq
    %v315 = vshrl.u32 %v314, 7
    %v316 = vsub.s32 1, %v315
    %v317 = vrot.slane %v270, %v316
    %v320 = vmul.f32 %v307, %v313
    %v321 = vmul.f32 %v308, %v317
    %v322 = vlaneseq
    %v323 = vshrl.u32 %v322, 7
    %v324 = vsub.s32 0, %v323
    %v325 = vrot.slane %v320, %v324
    %v326 = vlaneseq
    %v327 = vshrl.u32 %v326, 7
    %v328 = vsub.s32 0, %v327
    %v329 = vrot.slane %v321, %v328
    %v330 = vmul.f32 %v287, %v325
    %v331 = vmul.f32 %v288, %v329
    %v333 = vlaneseq
    %v334 = vshrl.u32 %v333, 7
    %v335 = vsub.s32 0, %v334
    %v336 = vrot.slane %v271, %v335
    %v337 = vlaneseq
    %v338 = vshrl.u32 %v337, 7
    %v339 = vsub.s32 1, %v338
    %v340 = vrot.slane %v271, %v339
    %v343 = vadd.f32 %v330, %v336
    %v344 = vadd.f32 %v331, %v340
    %v345 = vmul.f32 %v343, 0.2
    %v346 = vmul.f32 %v344, 0.2
    %v347 = vmax.f32 %v343, %v345
    %v348 = vmax.f32 %v344, %v346
    %v349 = vld [vmem:[#allocation8] sm:$0xff]
    %v350 = vld [vmem:[#allocation8 + $0x8] sm:$0xff]
    %v351 = vld [vmem:[#allocation8 + $0x10] sm:$0xff]
    %v352 = vld [vmem:[#allocation8 + $0x18] sm:$0xff]
    %v353 = vld [vmem:[#allocation8 + $0x20] sm:$0xff]
    %v354 = vld [vmem:[#allocation8 + $0x28] sm:$0xff]
    %v355 = vld [vmem:[#allocation8 + $0x30] sm:$0xff]
    %v356 = vld [vmem:[#allocation8 + $0x38] sm:$0xff]
    %v357 = vld [vmem:[#allocation8 + $0x40] sm:$0xff]
    %v358 = vld [vmem:[#allocation8 + $0x48] sm:$0xff]
    %v359 = vld [vmem:[#allocation8 + $0x50] sm:$0xff]
    %v360 = vld [vmem:[#allocation8 + $0x58] sm:$0xff]
    %v361 = vld [vmem:[#allocation8 + $0x60] sm:$0xff]
    %v362 = vld [vmem:[#allocation8 + $0x68] sm:$0xff]
    %v363 = vld [vmem:[#allocation8 + $0x70] sm:$0xff]
    %v364 = vld [vmem:[#allocation8 + $0x78] sm:$0xff]
    %v365 = vld [vmem:[#allocation8 + $0x80] sm:$0xff]
    %v366 = vld [vmem:[#allocation8 + $0x88] sm:$0xff]
    %v367 = vld [vmem:[#allocation8 + $0x90] sm:$0xff]
    %v368 = vld [vmem:[#allocation8 + $0x98] sm:$0xff]
    %v369 = vld [vmem:[#allocation8 + $0xa0] sm:$0xff]
    %v370 = vld [vmem:[#allocation8 + $0xa8] sm:$0xff]
    %v371 = vld [vmem:[#allocation8 + $0xb0] sm:$0xff]
    %v372 = vld [vmem:[#allocation8 + $0xb8] sm:$0xff]
    %v373 = vld [vmem:[#allocation8 + $0xc0] sm:$0xff]
    %v374 = vld [vmem:[#allocation8 + $0xc8] sm:$0xff]
    %v375 = vld [vmem:[#allocation8 + $0xd0] sm:$0xff]
    %v376 = vld [vmem:[#allocation8 + $0xd8] sm:$0xff]
    %v377 = vld [vmem:[#allocation8 + $0xe0] sm:$0xff]
    %v378 = vld [vmem:[#allocation8 + $0xe8] sm:$0xff]
    %v379 = vld [vmem:[#allocation8 + $0xf0] sm:$0xff]
    %v380 = vld [vmem:[#allocation8 + $0xf8] sm:$0xff]
    %v381 = vpack.c.bf16 %v347, %v347
    %v382 = vpack.c.bf16 %v348, %v348
    %v383 = vunpack.c.l.s8.bf16 %v349
    %v384 = vunpack.c.l.s8.bf16 %v350
    %v385 = vunpack.c.l.s8.bf16 %v351
    %v386 = vunpack.c.l.s8.bf16 %v352
    %v387 = vunpack.c.h.s8.bf16 %v349
    %v388 = vunpack.c.h.s8.bf16 %v350
    %v389 = vunpack.c.h.s8.bf16 %v351
    %v390 = vunpack.c.h.s8.bf16 %v352
    %v391 = vunpack.c.l.s8.bf16 %v353
    %v392 = vunpack.c.l.s8.bf16 %v354
    %v393 = vunpack.c.l.s8.bf16 %v355
    %v394 = vunpack.c.l.s8.bf16 %v356
    %v395 = vunpack.c.h.s8.bf16 %v353
    %v396 = vunpack.c.h.s8.bf16 %v354
    %v397 = vunpack.c.h.s8.bf16 %v355
    %v398 = vunpack.c.h.s8.bf16 %v356
    %v399 = vunpack.c.l.s8.bf16 %v357
    %v400 = vunpack.c.l.s8.bf16 %v358
    %v401 = vunpack.c.l.s8.bf16 %v359
    %v402 = vunpack.c.l.s8.bf16 %v360
    %v403 = vunpack.c.h.s8.bf16 %v357
    %v404 = vunpack.c.h.s8.bf16 %v358
    %v405 = vunpack.c.h.s8.bf16 %v359
    %v406 = vunpack.c.h.s8.bf16 %v360
    %v407 = vunpack.c.l.s8.bf16 %v361
    %v408 = vunpack.c.l.s8.bf16 %v362
    %v409 = vunpack.c.l.s8.bf16 %v363
    %v410 = vunpack.c.l.s8.bf16 %v364
    %v411 = vunpack.c.h.s8.bf16 %v361
    %v412 = vunpack.c.h.s8.bf16 %v362
    %v413 = vunpack.c.h.s8.bf16 %v363
    %v414 = vunpack.c.h.s8.bf16 %v364
    %v415 = vunpack.c.l.s8.bf16 %v365
    %v416 = vunpack.c.l.s8.bf16 %v366
    %v417 = vunpack.c.l.s8.bf16 %v367
    %v418 = vunpack.c.l.s8.bf16 %v368
    %v419 = vunpack.c.h.s8.bf16 %v365
    %v420 = vunpack.c.h.s8.bf16 %v366
    %v421 = vunpack.c.h.s8.bf16 %v367
    %v422 = vunpack.c.h.s8.bf16 %v368
    %v423 = vunpack.c.l.s8.bf16 %v369
    %v424 = vunpack.c.l.s8.bf16 %v370
    %v425 = vunpack.c.l.s8.bf16 %v371
    %v426 = vunpack.c.l.s8.bf16 %v372
    %v427 = vunpack.c.h.s8.bf16 %v369
    %v428 = vunpack.c.h.s8.bf16 %v370
    %v429 = vunpack.c.h.s8.bf16 %v371
    %v430 = vunpack.c.h.s8.bf16 %v372
    %v431 = vunpack.c.l.s8.bf16 %v373
    %v432 = vunpack.c.l.s8.bf16 %v374
    %v433 = vunpack.c.l.s8.bf16 %v375
    %v434 = vunpack.c.l.s8.bf16 %v376
    %v435 = vunpack.c.h.s8.bf16 %v373
    %v436 = vunpack.c.h.s8.bf16 %v374
    %v437 = vunpack.c.h.s8.bf16 %v375
    %v438 = vunpack.c.h.s8.bf16 %v376
    %v439 = vunpack.c.l.s8.bf16 %v377
    %v440 = vunpack.c.l.s8.bf16 %v378
    %v441 = vunpack.c.l.s8.bf16 %v379
    %v442 = vunpack.c.l.s8.bf16 %v380
    %v443 = vunpack.c.h.s8.bf16 %v377
    %v444 = vunpack.c.h.s8.bf16 %v378
    %v445 = vunpack.c.h.s8.bf16 %v379
    %v446 = vunpack.c.h.s8.bf16 %v380
    %447 = vmatprep.subr.bf16.mxu0 %v384
    %448 = vmatpush1.bf16.msra.mxu0 %v383
    %449 = vmatprep.subr.bf16.mxu0 %v388
    %450 = vmatpush1.bf16.msra.mxu0 %v387
    %451 = vmatprep.subr.bf16.mxu0 %v392
    %452 = vmatpush1.bf16.msra.mxu0 %v391
    %453 = vmatprep.subr.bf16.mxu0 %v396
    %454 = vmatpush1.bf16.msra.mxu0 %v395
    %455 = vmatprep.subr.bf16.mxu0 %v400
    %456 = vmatpush1.bf16.msra.mxu0 %v399
    %457 = vmatprep.subr.bf16.mxu0 %v404
    %458 = vmatpush1.bf16.msra.mxu0 %v403
    %459 = vmatprep.subr.bf16.mxu0 %v408
    %460 = vmatpush1.bf16.msra.mxu0 %v407
    %461 = vmatprep.subr.bf16.mxu0 %v412
    %462 = vmatpush1.bf16.msra.mxu0 %v411
    %463 = vmatprep.subr.bf16.mxu0 %v416
    %464 = vmatpush1.bf16.msra.mxu0 %v415
    %465 = vmatprep.subr.bf16.mxu0 %v420
    %466 = vmatpush1.bf16.msra.mxu0 %v419
    %467 = vmatprep.subr.bf16.mxu0 %v424
    %468 = vmatpush1.bf16.msra.mxu0 %v423
    %469 = vmatprep.subr.bf16.mxu0 %v428
    %470 = vmatpush1.bf16.msra.mxu0 %v427
    %471 = vmatprep.subr.bf16.mxu0 %v432
    %472 = vmatpush1.bf16.msra.mxu0 %v431
    %473 = vmatprep.subr.bf16.mxu0 %v436
    %474 = vmatpush1.bf16.msra.mxu0 %v435
    %475 = vmatprep.subr.bf16.mxu0 %v440
    %476 = vmatpush1.bf16.msra.mxu0 %v439
    %477 = vmatprep.subr.bf16.mxu0 %v444
    %478 = vmatpush1.bf16.msra.mxu0 %v443
    %479 = vmatprep.mubr.bf16.mxu0 %v382
    %480 = vmatmul.mubr.bf16.gmra.mrb[0].mxu0 %v381
    %v481 = vpop.f32.mrb[0].mxu0
    %v482 = vadd.f32 0.0, %v481
    %v483 = vpop.f32.mrb[0].mxu0
    %v484 = vadd.f32 0.0, %v483
    %v485 = vpop.f32.mrb[0].mxu0
    %v486 = vpop.f32.mrb[0].mxu0
    %487 = vdwg.mxu0
    %488 = vmatprep.subr.bf16.mxu0 %v386
    %489 = vmatpush1.bf16.msra.mxu0 %v385
    %490 = vmatprep.subr.bf16.mxu0 %v390
    %491 = vmatpush1.bf16.msra.mxu0 %v389
    %492 = vmatprep.subr.bf16.mxu0 %v394
    %493 = vmatpush1.bf16.msra.mxu0 %v393
    %494 = vmatprep.subr.bf16.mxu0 %v398
    %495 = vmatpush1.bf16.msra.mxu0 %v397
    %496 = vmatprep.subr.bf16.mxu0 %v402
    %497 = vmatpush1.bf16.msra.mxu0 %v401
    %498 = vmatprep.subr.bf16.mxu0 %v406
    %499 = vmatpush1.bf16.msra.mxu0 %v405
    %500 = vmatprep.subr.bf16.mxu0 %v410
    %501 = vmatpush1.bf16.msra.mxu0 %v409
    %502 = vmatprep.subr.bf16.mxu0 %v414
    %503 = vmatpush1.bf16.msra.mxu0 %v413
    %504 = vmatprep.subr.bf16.mxu0 %v418
    %505 = vmatpush1.bf16.msra.mxu0 %v417
    %506 = vmatprep.subr.bf16.mxu0 %v422
    %507 = vmatpush1.bf16.msra.mxu0 %v421
    %508 = vmatprep.subr.bf16.mxu0 %v426
    %509 = vmatpush1.bf16.msra.mxu0 %v425
    %510 = vmatprep.subr.bf16.mxu0 %v430
    %511 = vmatpush1.bf16.msra.mxu0 %v429
    %512 = vmatprep.subr.bf16.mxu0 %v434
    %513 = vmatpush1.bf16.msra.mxu0 %v433
    %514 = vmatprep.subr.bf16.mxu0 %v438
    %515 = vmatpush1.bf16.msra.mxu0 %v437
    %516 = vmatprep.subr.bf16.mxu0 %v442
    %517 = vmatpush1.bf16.msra.mxu0 %v441
    %518 = vmatprep.subr.bf16.mxu0 %v446
    %519 = vmatpush1.bf16.msra.mxu0 %v445
    %520 = vmatprep.mubr.bf16.mxu0 %v382
    %521 = vmatmul.mubr.bf16.gmra.mrb[0].mxu0 %v381
    %v522 = vpop.f32.mrb[0].mxu0
    %v523 = vadd.f32 0.0, %v522
    %v524 = vpop.f32.mrb[0].mxu0
    %v525 = vadd.f32 0.0, %v524
    %v526 = vpop.f32.mrb[0].mxu0
    %v527 = vpop.f32.mrb[0].mxu0
    %528 = vdwg.mxu0
    %v529 = vld [vmem:[#allocation13 + $0x11] sm:$0xf]
    %v531 = vlaneseq
    %v532 = vshrl.u32 %v531, 7
    %v533 = vsub.s32 0, %v532
    %v534 = vrot.slane %v529, %v533
    %v535 = vlaneseq
    %v536 = vshrl.u32 %v535, 7
    %v537 = vsub.s32 1, %v536
    %v538 = vrot.slane %v529, %v537
    %v539 = vlaneseq
    %v540 = vshrl.u32 %v539, 7
    %v541 = vsub.s32 2, %v540
    %v542 = vrot.slane %v529, %v541
    %v543 = vlaneseq
    %v544 = vshrl.u32 %v543, 7
    %v545 = vsub.s32 3, %v544
    %v546 = vrot.slane %v529, %v545
    %v551 = vmul.f32 %v482, %v534
    %v552 = vmul.f32 %v484, %v538
    %v553 = vmul.f32 %v523, %v542
    %v554 = vmul.f32 %v525, %v546
    %v555 = vld [vmem:[#allocation13 + $0x9] sm:$0xf]
    %v556 = vld [vmem:[#allocation13 + $0xd] sm:$0xf]
    %v557 = vrot.slane %v551, 4
    %v558 = vadd.f32 %v551, %v557
    %v559 = vrot.slane %v558, 2
    %v560 = vadd.f32 %v558, %v559
    %v561 = vrot.slane %v560, 1
    %v562 = vadd.f32 %v560, %v561
    %v563 = vrot.slane %v552, 4
    %v564 = vadd.f32 %v552, %v563
    %v565 = vrot.slane %v564, 2
    %v566 = vadd.f32 %v564, %v565
    %v567 = vrot.slane %v566, 1
    %v568 = vadd.f32 %v566, %v567
    %v569 = vrot.slane %v553, 4
    %v570 = vadd.f32 %v553, %v569
    %v571 = vrot.slane %v570, 2
    %v572 = vadd.f32 %v570, %v571
    %v573 = vrot.slane %v572, 1
    %v574 = vadd.f32 %v572, %v573
    %v575 = vrot.slane %v554, 4
    %v576 = vadd.f32 %v554, %v575
    %v577 = vrot.slane %v576, 2
    %v578 = vadd.f32 %v576, %v577
    %v579 = vrot.slane %v578, 1
    %v580 = vadd.f32 %v578, %v579
    %v581 = vmul.f32 %v562, %v284
    %v582 = vmul.f32 %v568, %v284
    %v583 = vmul.f32 %v574, %v284
    %v584 = vmul.f32 %v580, %v284
    %v585 = vsub.f32 %v551, %v581
    %v586 = vsub.f32 %v552, %v582
    %v587 = vsub.f32 %v553, %v583
    %v588 = vsub.f32 %v554, %v584
    %v589 = vmul.f32 %v585, %v585
    %v590 = vmul.f32 %v586, %v586
    %v591 = vmul.f32 %v587, %v587
    %v592 = vmul.f32 %v588, %v588
    %v593 = vrot.slane %v589, 4
    %v594 = vadd.f32 %v589, %v593
    %v595 = vrot.slane %v594, 2
    %v596 = vadd.f32 %v594, %v595
    %v597 = vrot.slane %v596, 1
    %v598 = vadd.f32 %v596, %v597
    %v599 = vrot.slane %v590, 4
    %v600 = vadd.f32 %v590, %v599
    %v601 = vrot.slane %v600, 2
    %v602 = vadd.f32 %v600, %v601
    %v603 = vrot.slane %v602, 1
    %v604 = vadd.f32 %v602, %v603
    %v605 = vrot.slane %v591, 4
    %v606 = vadd.f32 %v591, %v605
    %v607 = vrot.slane %v606, 2
    %v608 = vadd.f32 %v606, %v607
    %v609 = vrot.slane %v608, 1
    %v610 = vadd.f32 %v608, %v609
    %v611 = vrot.slane %v592, 4
    %v612 = vadd.f32 %v592, %v611
    %v613 = vrot.slane %v612, 2
    %v614 = vadd.f32 %v612, %v613
    %v615 = vrot.slane %v614, 1
    %v616 = vadd.f32 %v614, %v615
    %v617 = vmul.f32 %v598, %v284
    %v618 = vmul.f32 %v604, %v284
    %v619 = vmul.f32 %v610, %v284
    %v620 = vmul.f32 %v616, %v284
    %v621 = vadd.f32 %v617, 0.8
    %v622 = vadd.f32 %v618, 0.8
    %v623 = vadd.f32 %v619, 0.8
    %v624 = vadd.f32 %v620, 0.8
    %v625 = vrsqrt.pop %v621
    %v626 = vrsqrt.pop %v622
    %v627 = vrsqrt.pop %v623
    %v628 = vrsqrt.pop %v624
    %v630 = vlaneseq
    %v631 = vshrl.u32 %v630, 7
    %v632 = vsub.s32 0, %v631
    %v633 = vrot.slane %v555, %v632
    %v634 = vlaneseq
    %v635 = vshrl.u32 %v634, 7
    %v636 = vsub.s32 1, %v635
    %v637 = vrot.slane %v555, %v636
    %v638 = vlaneseq
    %v639 = vshrl.u32 %v638, 7
    %v640 = vsub.s32 2, %v639
    %v641 = vrot.slane %v555, %v640
    %v642 = vlaneseq
    %v643 = vshrl.u32 %v642, 7
    %v644 = vsub.s32 3, %v643
    %v645 = vrot.slane %v555, %v644
    %v650 = vmul.f32 %v625, %v633
    %v651 = vmul.f32 %v626, %v637
    %v652 = vmul.f32 %v627, %v641
    %v653 = vmul.f32 %v628, %v645
    %v654 = vlaneseq
    %v655 = vshrl.u32 %v654, 7
    %v656 = vsub.s32 0, %v655
    %v657 = vrot.slane %v650, %v656
    %v658 = vlaneseq
    %v659 = vshrl.u32 %v658, 7
    %v660 = vsub.s32 0, %v659
    %v661 = vrot.slane %v651, %v660
    %v662 = vlaneseq
    %v663 = vshrl.u32 %v662, 7
    %v664 = vsub.s32 0, %v663
    %v665 = vrot.slane %v652, %v664
    %v666 = vlaneseq
    %v667 = vshrl.u32 %v666, 7
    %v668 = vsub.s32 0, %v667
    %v669 = vrot.slane %v653, %v668
    %v670 = vmul.f32 %v585, %v657
    %v671 = vmul.f32 %v586, %v661
    %v672 = vmul.f32 %v587, %v665
    %v673 = vmul.f32 %v588, %v669
    %v675 = vlaneseq
    %v676 = vshrl.u32 %v675, 7
    %v677 = vsub.s32 0, %v676
    %v678 = vrot.slane %v556, %v677
    %v679 = vlaneseq
    %v680 = vshrl.u32 %v679, 7
    %v681 = vsub.s32 1, %v680
    %v682 = vrot.slane %v556, %v681
    %v683 = vlaneseq
    %v684 = vshrl.u32 %v683, 7
    %v685 = vsub.s32 2, %v684
    %v686 = vrot.slane %v556, %v685
    %v687 = vlaneseq
    %v688 = vshrl.u32 %v687, 7
    %v689 = vsub.s32 3, %v688
    %v690 = vrot.slane %v556, %v689
    %v695 = vadd.f32 %v670, %v678
    %v696 = vadd.f32 %v671, %v682
    %v697 = vadd.f32 %v672, %v686
    %v698 = vadd.f32 %v673, %v690
    %v699 = vmul.f32 %v695, 0.2
    %v700 = vmul.f32 %v696, 0.2
    %v701 = vmul.f32 %v697, 0.2
    %v702 = vmul.f32 %v698, 0.2
    %v703 = vmax.f32 %v695, %v699
    %v704 = vmax.f32 %v696, %v700
    %v705 = vmax.f32 %v697, %v701
    %v706 = vmax.f32 %v698, %v702
    %v707 = vld [vmem:[#allocation10] sm:$0xff]
    %v708 = vld [vmem:[#allocation10 + $0x8] sm:$0xff]
    %v709 = vld [vmem:[#allocation10 + $0x10] sm:$0xff]
    %v710 = vld [vmem:[#allocation10 + $0x18] sm:$0xff]
    %v711 = vld [vmem:[#allocation10 + $0x20] sm:$0xff]
    %v712 = vld [vmem:[#allocation10 + $0x28] sm:$0xff]
    %v713 = vld [vmem:[#allocation10 + $0x30] sm:$0xff]
    %v714 = vld [vmem:[#allocation10 + $0x38] sm:$0xff]
    %v715 = vld [vmem:[#allocation10 + $0x40] sm:$0xff]
    %v716 = vld [vmem:[#allocation10 + $0x48] sm:$0xff]
    %v717 = vld [vmem:[#allocation10 + $0x50] sm:$0xff]
    %v718 = vld [vmem:[#allocation10 + $0x58] sm:$0xff]
    %v719 = vld [vmem:[#allocation10 + $0x60] sm:$0xff]
    %v720 = vld [vmem:[#allocation10 + $0x68] sm:$0xff]
    %v721 = vld [vmem:[#allocation10 + $0x70] sm:$0xff]
    %v722 = vld [vmem:[#allocation10 + $0x78] sm:$0xff]
    %v723 = vld [vmem:[#allocation10 + $0x80] sm:$0xff]
    %v724 = vld [vmem:[#allocation10 + $0x88] sm:$0xff]
    %v725 = vld [vmem:[#allocation10 + $0x90] sm:$0xff]
    %v726 = vld [vmem:[#allocation10 + $0x98] sm:$0xff]
    %v727 = vld [vmem:[#allocation10 + $0xa0] sm:$0xff]
    %v728 = vld [vmem:[#allocation10 + $0xa8] sm:$0xff]
    %v729 = vld [vmem:[#allocation10 + $0xb0] sm:$0xff]
    %v730 = vld [vmem:[#allocation10 + $0xb8] sm:$0xff]
    %v731 = vld [vmem:[#allocation10 + $0xc0] sm:$0xff]
    %v732 = vld [vmem:[#allocation10 + $0xc8] sm:$0xff]
    %v733 = vld [vmem:[#allocation10 + $0xd0] sm:$0xff]
    %v734 = vld [vmem:[#allocation10 + $0xd8] sm:$0xff]
    %v735 = vld [vmem:[#allocation10 + $0xe0] sm:$0xff]
    %v736 = vld [vmem:[#allocation10 + $0xe8] sm:$0xff]
    %v737 = vld [vmem:[#allocation10 + $0xf0] sm:$0xff]
    %v738 = vld [vmem:[#allocation10 + $0xf8] sm:$0xff]
    %v739 = vld [vmem:[#allocation10 + $0x100] sm:$0xff]
    %v740 = vld [vmem:[#allocation10 + $0x108] sm:$0xff]
    %v741 = vld [vmem:[#allocation10 + $0x110] sm:$0xff]
    %v742 = vld [vmem:[#allocation10 + $0x118] sm:$0xff]
    %v743 = vld [vmem:[#allocation10 + $0x120] sm:$0xff]
    %v744 = vld [vmem:[#allocation10 + $0x128] sm:$0xff]
    %v745 = vld [vmem:[#allocation10 + $0x130] sm:$0xff]
    %v746 = vld [vmem:[#allocation10 + $0x138] sm:$0xff]
    %v747 = vld [vmem:[#allocation10 + $0x140] sm:$0xff]
    %v748 = vld [vmem:[#allocation10 + $0x148] sm:$0xff]
    %v749 = vld [vmem:[#allocation10 + $0x150] sm:$0xff]
    %v750 = vld [vmem:[#allocation10 + $0x158] sm:$0xff]
    %v751 = vld [vmem:[#allocation10 + $0x160] sm:$0xff]
    %v752 = vld [vmem:[#allocation10 + $0x168] sm:$0xff]
    %v753 = vld [vmem:[#allocation10 + $0x170] sm:$0xff]
    %v754 = vld [vmem:[#allocation10 + $0x178] sm:$0xff]
    %v755 = vld [vmem:[#allocation10 + $0x180] sm:$0xff]
    %v756 = vld [vmem:[#allocation10 + $0x188] sm:$0xff]
    %v757 = vld [vmem:[#allocation10 + $0x190] sm:$0xff]
    %v758 = vld [vmem:[#allocation10 + $0x198] sm:$0xff]
    %v759 = vld [vmem:[#allocation10 + $0x1a0] sm:$0xff]
    %v760 = vld [vmem:[#allocation10 + $0x1a8] sm:$0xff]
    %v761 = vld [vmem:[#allocation10 + $0x1b0] sm:$0xff]
    %v762 = vld [vmem:[#allocation10 + $0x1b8] sm:$0xff]
    %v763 = vld [vmem:[#allocation10 + $0x1c0] sm:$0xff]
    %v764 = vld [vmem:[#allocation10 + $0x1c8] sm:$0xff]
    %v765 = vld [vmem:[#allocation10 + $0x1d0] sm:$0xff]
    %v766 = vld [vmem:[#allocation10 + $0x1d8] sm:$0xff]
    %v767 = vld [vmem:[#allocation10 + $0x1e0] sm:$0xff]
    %v768 = vld [vmem:[#allocation10 + $0x1e8] sm:$0xff]
    %v769 = vld [vmem:[#allocation10 + $0x1f0] sm:$0xff]
    %v770 = vld [vmem:[#allocation10 + $0x1f8] sm:$0xff]
    %v771 = vld [vmem:[#allocation10 + $0x200] sm:$0xff]
    %v772 = vld [vmem:[#allocation10 + $0x208] sm:$0xff]
    %v773 = vld [vmem:[#allocation10 + $0x210] sm:$0xff]
    %v774 = vld [vmem:[#allocation10 + $0x218] sm:$0xff]
    %v775 = vld [vmem:[#allocation10 + $0x220] sm:$0xff]
    %v776 = vld [vmem:[#allocation10 + $0x228] sm:$0xff]
    %v777 = vld [vmem:[#allocation10 + $0x230] sm:$0xff]
    %v778 = vld [vmem:[#allocation10 + $0x238] sm:$0xff]
    %v779 = vld [vmem:[#allocation10 + $0x240] sm:$0xff]
    %v780 = vld [vmem:[#allocation10 + $0x248] sm:$0xff]
    %v781 = vld [vmem:[#allocation10 + $0x250] sm:$0xff]
    %v782 = vld [vmem:[#allocation10 + $0x258] sm:$0xff]
    %v783 = vld [vmem:[#allocation10 + $0x260] sm:$0xff]
    %v784 = vld [vmem:[#allocation10 + $0x268] sm:$0xff]
    %v785 = vld [vmem:[#allocation10 + $0x270] sm:$0xff]
    %v786 = vld [vmem:[#allocation10 + $0x278] sm:$0xff]
    %v787 = vld [vmem:[#allocation10 + $0x280] sm:$0xff]
    %v788 = vld [vmem:[#allocation10 + $0x288] sm:$0xff]
    %v789 = vld [vmem:[#allocation10 + $0x290] sm:$0xff]
    %v790 = vld [vmem:[#allocation10 + $0x298] sm:$0xff]
    %v791 = vld [vmem:[#allocation10 + $0x2a0] sm:$0xff]
    %v792 = vld [vmem:[#allocation10 + $0x2a8] sm:$0xff]
    %v793 = vld [vmem:[#allocation10 + $0x2b0] sm:$0xff]
    %v794 = vld [vmem:[#allocation10 + $0x2b8] sm:$0xff]
    %v795 = vld [vmem:[#allocation10 + $0x2c0] sm:$0xff]
    %v796 = vld [vmem:[#allocation10 + $0x2c8] sm:$0xff]
    %v797 = vld [vmem:[#allocation10 + $0x2d0] sm:$0xff]
    %v798 = vld [vmem:[#allocation10 + $0x2d8] sm:$0xff]
    %v799 = vld [vmem:[#allocation10 + $0x2e0] sm:$0xff]
    %v800 = vld [vmem:[#allocation10 + $0x2e8] sm:$0xff]
    %v801 = vld [vmem:[#allocation10 + $0x2f0] sm:$0xff]
    %v802 = vld [vmem:[#allocation10 + $0x2f8] sm:$0xff]
    %v803 = vld [vmem:[#allocation10 + $0x300] sm:$0xff]
    %v804 = vld [vmem:[#allocation10 + $0x308] sm:$0xff]
    %v805 = vld [vmem:[#allocation10 + $0x310] sm:$0xff]
    %v806 = vld [vmem:[#allocation10 + $0x318] sm:$0xff]
    %v807 = vld [vmem:[#allocation10 + $0x320] sm:$0xff]
    %v808 = vld [vmem:[#allocation10 + $0x328] sm:$0xff]
    %v809 = vld [vmem:[#allocation10 + $0x330] sm:$0xff]
    %v810 = vld [vmem:[#allocation10 + $0x338] sm:$0xff]
    %v811 = vld [vmem:[#allocation10 + $0x340] sm:$0xff]
    %v812 = vld [vmem:[#allocation10 + $0x348] sm:$0xff]
    %v813 = vld [vmem:[#allocation10 + $0x350] sm:$0xff]
    %v814 = vld [vmem:[#allocation10 + $0x358] sm:$0xff]
    %v815 = vld [vmem:[#allocation10 + $0x360] sm:$0xff]
    %v816 = vld [vmem:[#allocation10 + $0x368] sm:$0xff]
    %v817 = vld [vmem:[#allocation10 + $0x370] sm:$0xff]
    %v818 = vld [vmem:[#allocation10 + $0x378] sm:$0xff]
    %v819 = vld [vmem:[#allocation10 + $0x380] sm:$0xff]
    %v820 = vld [vmem:[#allocation10 + $0x388] sm:$0xff]
    %v821 = vld [vmem:[#allocation10 + $0x390] sm:$0xff]
    %v822 = vld [vmem:[#allocation10 + $0x398] sm:$0xff]
    %v823 = vld [vmem:[#allocation10 + $0x3a0] sm:$0xff]
    %v824 = vld [vmem:[#allocation10 + $0x3a8] sm:$0xff]
    %v825 = vld [vmem:[#allocation10 + $0x3b0] sm:$0xff]
    %v826 = vld [vmem:[#allocation10 + $0x3b8] sm:$0xff]
    %v827 = vld [vmem:[#allocation10 + $0x3c0] sm:$0xff]
    %v828 = vld [vmem:[#allocation10 + $0x3c8] sm:$0xff]
    %v829 = vld [vmem:[#allocation10 + $0x3d0] sm:$0xff]
    %v830 = vld [vmem:[#allocation10 + $0x3d8] sm:$0xff]
    %v831 = vld [vmem:[#allocation10 + $0x3e0] sm:$0xff]
    %v832 = vld [vmem:[#allocation10 + $0x3e8] sm:$0xff]
    %v833 = vld [vmem:[#allocation10 + $0x3f0] sm:$0xff]
    %v834 = vld [vmem:[#allocation10 + $0x3f8] sm:$0xff]
    %v835 = vpack.c.bf16 %v703, %v703
    %v836 = vpack.c.bf16 %v704, %v704
    %v837 = vpack.c.bf16 %v705, %v705
    %v838 = vpack.c.bf16 %v706, %v706
    %v839 = vunpack.c.l.s8.bf16 %v707
    %v840 = vunpack.c.l.s8.bf16 %v708
    %v841 = vunpack.c.l.s8.bf16 %v709
    %v842 = vunpack.c.l.s8.bf16 %v710
    %v843 = vunpack.c.l.s8.bf16 %v711
    %v844 = vunpack.c.l.s8.bf16 %v712
    %v845 = vunpack.c.l.s8.bf16 %v713
    %v846 = vunpack.c.l.s8.bf16 %v714
    %v847 = vunpack.c.h.s8.bf16 %v707
    %v848 = vunpack.c.h.s8.bf16 %v708
    %v849 = vunpack.c.h.s8.bf16 %v709
    %v850 = vunpack.c.h.s8.bf16 %v710
    %v851 = vunpack.c.h.s8.bf16 %v711
    %v852 = vunpack.c.h.s8.bf16 %v712
    %v853 = vunpack.c.h.s8.bf16 %v713
    %v854 = vunpack.c.h.s8.bf16 %v714
    %v855 = vunpack.c.l.s8.bf16 %v715
    %v856 = vunpack.c.l.s8.bf16 %v716
    %v857 = vunpack.c.l.s8.bf16 %v717
    %v858 = vunpack.c.l.s8.bf16 %v718
    %v859 = vunpack.c.l.s8.bf16 %v719
    %v860 = vunpack.c.l.s8.bf16 %v720
    %v861 = vunpack.c.l.s8.bf16 %v721
    %v862 = vunpack.c.l.s8.bf16 %v722
    %v863 = vunpack.c.h.s8.bf16 %v715
    %v864 = vunpack.c.h.s8.bf16 %v716
    %v865 = vunpack.c.h.s8.bf16 %v717
    %v866 = vunpack.c.h.s8.bf16 %v718
    %v867 = vunpack.c.h.s8.bf16 %v719
    %v868 = vunpack.c.h.s8.bf16 %v720
    %v869 = vunpack.c.h.s8.bf16 %v721
    %v870 = vunpack.c.h.s8.bf16 %v722
    %v871 = vunpack.c.l.s8.bf16 %v723
    %v872 = vunpack.c.l.s8.bf16 %v724
    %v873 = vunpack.c.l.s8.bf16 %v725
    %v874 = vunpack.c.l.s8.bf16 %v726
    %v875 = vunpack.c.l.s8.bf16 %v727
    %v876 = vunpack.c.l.s8.bf16 %v728
    %v877 = vunpack.c.l.s8.bf16 %v729
    %v878 = vunpack.c.l.s8.bf16 %v730
    %v879 = vunpack.c.h.s8.bf16 %v723
    %v880 = vunpack.c.h.s8.bf16 %v724
    %v881 = vunpack.c.h.s8.bf16 %v725
    %v882 = vunpack.c.h.s8.bf16 %v726
    %v883 = vunpack.c.h.s8.bf16 %v727
    %v884 = vunpack.c.h.s8.bf16 %v728
    %v885 = vunpack.c.h.s8.bf16 %v729
    %v886 = vunpack.c.h.s8.bf16 %v730
    %v887 = vunpack.c.l.s8.bf16 %v731
    %v888 = vunpack.c.l.s8.bf16 %v732
    %v889 = vunpack.c.l.s8.bf16 %v733
    %v890 = vunpack.c.l.s8.bf16 %v734
    %v891 = vunpack.c.l.s8.bf16 %v735
    %v892 = vunpack.c.l.s8.bf16 %v736
    %v893 = vunpack.c.l.s8.bf16 %v737
    %v894 = vunpack.c.l.s8.bf16 %v738
    %v895 = vunpack.c.h.s8.bf16 %v731
    %v896 = vunpack.c.h.s8.bf16 %v732
    %v897 = vunpack.c.h.s8.bf16 %v733
    %v898 = vunpack.c.h.s8.bf16 %v734
    %v899 = vunpack.c.h.s8.bf16 %v735
    %v900 = vunpack.c.h.s8.bf16 %v736
    %v901 = vunpack.c.h.s8.bf16 %v737
    %v902 = vunpack.c.h.s8.bf16 %v738
    %v903 = vunpack.c.l.s8.bf16 %v739
    %v904 = vunpack.c.l.s8.bf16 %v740
    %v905 = vunpack.c.l.s8.bf16 %v741
    %v906 = vunpack.c.l.s8.bf16 %v742
    %v907 = vunpack.c.l.s8.bf16 %v743
    %v908 = vunpack.c.l.s8.bf16 %v744
    %v909 = vunpack.c.l.s8.bf16 %v745
    %v910 = vunpack.c.l.s8.bf16 %v746
    %v911 = vunpack.c.h.s8.bf16 %v739
    %v912 = vunpack.c.h.s8.bf16 %v740
    %v913 = vunpack.c.h.s8.bf16 %v741
    %v914 = vunpack.c.h.s8.bf16 %v742
    %v915 = vunpack.c.h.s8.bf16 %v743
    %v916 = vunpack.c.h.s8.bf16 %v744
    %v917 = vunpack.c.h.s8.bf16 %v745
    %v918 = vunpack.c.h.s8.bf16 %v746
    %v919 = vunpack.c.l.s8.bf16 %v747
    %v920 = vunpack.c.l.s8.bf16 %v748
    %v921 = vunpack.c.l.s8.bf16 %v749
    %v922 = vunpack.c.l.s8.bf16 %v750
    %v923 = vunpack.c.l.s8.bf16 %v751
    %v924 = vunpack.c.l.s8.bf16 %v752
    %v925 = vunpack.c.l.s8.bf16 %v753
    %v926 = vunpack.c.l.s8.bf16 %v754
    %v927 = vunpack.c.h.s8.bf16 %v747
    %v928 = vunpack.c.h.s8.bf16 %v748
    %v929 = vunpack.c.h.s8.bf16 %v749
    %v930 = vunpack.c.h.s8.bf16 %v750
    %v931 = vunpack.c.h.s8.bf16 %v751
    %v932 = vunpack.c.h.s8.bf16 %v752
    %v933 = vunpack.c.h.s8.bf16 %v753
    %v934 = vunpack.c.h.s8.bf16 %v754
    %v935 = vunpack.c.l.s8.bf16 %v755
    %v936 = vunpack.c.l.s8.bf16 %v756
    %v937 = vunpack.c.l.s8.bf16 %v757
    %v938 = vunpack.c.l.s8.bf16 %v758
    %v939 = vunpack.c.l.s8.bf16 %v759
    %v940 = vunpack.c.l.s8.bf16 %v760
    %v941 = vunpack.c.l.s8.bf16 %v761
    %v942 = vunpack.c.l.s8.bf16 %v762
    %v943 = vunpack.c.h.s8.bf16 %v755
    %v944 = vunpack.c.h.s8.bf16 %v756
    %v945 = vunpack.c.h.s8.bf16 %v757
    %v946 = vunpack.c.h.s8.bf16 %v758
    %v947 = vunpack.c.h.s8.bf16 %v759
    %v948 = vunpack.c.h.s8.bf16 %v760
    %v949 = vunpack.c.h.s8.bf16 %v761
    %v950 = vunpack.c.h.s8.bf16 %v762
    %v951 = vunpack.c.l.s8.bf16 %v763
    %v952 = vunpack.c.l.s8.bf16 %v764
    %v953 = vunpack.c.l.s8.bf16 %v765
    %v954 = vunpack.c.l.s8.bf16 %v766
    %v955 = vunpack.c.l.s8.bf16 %v767
    %v956 = vunpack.c.l.s8.bf16 %v768
    %v957 = vunpack.c.l.s8.bf16 %v769
    %v958 = vunpack.c.l.s8.bf16 %v770
    %v959 = vunpack.c.h.s8.bf16 %v763
    %v960 = vunpack.c.h.s8.bf16 %v764
    %v961 = vunpack.c.h.s8.bf16 %v765
    %v962 = vunpack.c.h.s8.bf16 %v766
    %v963 = vunpack.c.h.s8.bf16 %v767
    %v964 = vunpack.c.h.s8.bf16 %v768
    %v965 = vunpack.c.h.s8.bf16 %v769
    %v966 = vunpack.c.h.s8.bf16 %v770
    %v967 = vunpack.c.l.s8.bf16 %v771
    %v968 = vunpack.c.l.s8.bf16 %v772
    %v969 = vunpack.c.l.s8.bf16 %v773
    %v970 = vunpack.c.l.s8.bf16 %v774
    %v971 = vunpack.c.l.s8.bf16 %v775
    %v972 = vunpack.c.l.s8.bf16 %v776
    %v973 = vunpack.c.l.s8.bf16 %v777
    %v974 = vunpack.c.l.s8.bf16 %v778
    %v975 = vunpack.c.h.s8.bf16 %v771
    %v976 = vunpack.c.h.s8.bf16 %v772
    %v977 = vunpack.c.h.s8.bf16 %v773
    %v978 = vunpack.c.h.s8.bf16 %v774
    %v979 = vunpack.c.h.s8.bf16 %v775
    %v980 = vunpack.c.h.s8.bf16 %v776
    %v981 = vunpack.c.h.s8.bf16 %v777
    %v982 = vunpack.c.h.s8.bf16 %v778
    %v983 = vunpack.c.l.s8.bf16 %v779
    %v984 = vunpack.c.l.s8.bf16 %v780
    %v985 = vunpack.c.l.s8.bf16 %v781
    %v986 = vunpack.c.l.s8.bf16 %v782
    %v987 = vunpack.c.l.s8.bf16 %v783
    %v988 = vunpack.c.l.s8.bf16 %v784
    %v989 = vunpack.c.l.s8.bf16 %v785
    %v990 = vunpack.c.l.s8.bf16 %v786
    %v991 = vunpack.c.h.s8.bf16 %v779
    %v992 = vunpack.c.h.s8.bf16 %v780
    %v993 = vunpack.c.h.s8.bf16 %v781
    %v994 = vunpack.c.h.s8.bf16 %v782
    %v995 = vunpack.c.h.s8.bf16 %v783
    %v996 = vunpack.c.h.s8.bf16 %v784
    %v997 = vunpack.c.h.s8.bf16 %v785
    %v998 = vunpack.c.h.s8.bf16 %v786
    %v999 = vunpack.c.l.s8.bf16 %v787
    %v1000 = vunpack.c.l.s8.bf16 %v788
    %v1001 = vunpack.c.l.s8.bf16 %v789
    %v1002 = vunpack.c.l.s8.bf16 %v790
    %v1003 = vunpack.c.l.s8.bf16 %v791
    %v1004 = vunpack.c.l.s8.bf16 %v792
    %v1005 = vunpack.c.l.s8.bf16 %v793
    %v1006 = vunpack.c.l.s8.bf16 %v794
    %v1007 = vunpack.c.h.s8.bf16 %v787
    %v1008 = vunpack.c.h.s8.bf16 %v788
    %v1009 = vunpack.c.h.s8.bf16 %v789
    %v1010 = vunpack.c.h.s8.bf16 %v790
    %v1011 = vunpack.c.h.s8.bf16 %v791
    %v1012 = vunpack.c.h.s8.bf16 %v792
    %v1013 = vunpack.c.h.s8.bf16 %v793
    %v1014 = vunpack.c.h.s8.bf16 %v794
    %v1015 = vunpack.c.l.s8.bf16 %v795
    %v1016 = vunpack.c.l.s8.bf16 %v796
    %v1017 = vunpack.c.l.s8.bf16 %v797
    %v1018 = vunpack.c.l.s8.bf16 %v798
    %v1019 = vunpack.c.l.s8.bf16 %v799
    %v1020 = vunpack.c.l.s8.bf16 %v800
    %v1021 = vunpack.c.l.s8.bf16 %v801
    %v1022 = vunpack.c.l.s8.bf16 %v802
    %v1023 = vunpack.c.h.s8.bf16 %v795
    %v1024 = vunpack.c.h.s8.bf16 %v796
    %v1025 = vunpack.c.h.s8.bf16 %v797
    %v1026 = vunpack.c.h.s8.bf16 %v798
    %v1027 = vunpack.c.h.s8.bf16 %v799
    %v1028 = vunpack.c.h.s8.bf16 %v800
    %v1029 = vunpack.c.h.s8.bf16 %v801
    %v1030 = vunpack.c.h.s8.bf16 %v802
    %v1031 = vunpack.c.l.s8.bf16 %v803
    %v1032 = vunpack.c.l.s8.bf16 %v804
    %v1033 = vunpack.c.l.s8.bf16 %v805
    %v1034 = vunpack.c.l.s8.bf16 %v806
    %v1035 = vunpack.c.l.s8.bf16 %v807
    %v1036 = vunpack.c.l.s8.bf16 %v808
    %v1037 = vunpack.c.l.s8.bf16 %v809
    %v1038 = vunpack.c.l.s8.bf16 %v810
    %v1039 = vunpack.c.h.s8.bf16 %v803
    %v1040 = vunpack.c.h.s8.bf16 %v804
    %v1041 = vunpack.c.h.s8.bf16 %v805
    %v1042 = vunpack.c.h.s8.bf16 %v806
    %v1043 = vunpack.c.h.s8.bf16 %v807
    %v1044 = vunpack.c.h.s8.bf16 %v808
    %v1045 = vunpack.c.h.s8.bf16 %v809
    %v1046 = vunpack.c.h.s8.bf16 %v810
    %v1047 = vunpack.c.l.s8.bf16 %v811
    %v1048 = vunpack.c.l.s8.bf16 %v812
    %v1049 = vunpack.c.l.s8.bf16 %v813
    %v1050 = vunpack.c.l.s8.bf16 %v814
    %v1051 = vunpack.c.l.s8.bf16 %v815
    %v1052 = vunpack.c.l.s8.bf16 %v816
    %v1053 = vunpack.c.l.s8.bf16 %v817
    %v1054 = vunpack.c.l.s8.bf16 %v818
    %v1055 = vunpack.c.h.s8.bf16 %v811
    %v1056 = vunpack.c.h.s8.bf16 %v812
    %v1057 = vunpack.c.h.s8.bf16 %v813
    %v1058 = vunpack.c.h.s8.bf16 %v814
    %v1059 = vunpack.c.h.s8.bf16 %v815
    %v1060 = vunpack.c.h.s8.bf16 %v816
    %v1061 = vunpack.c.h.s8.bf16 %v817
    %v1062 = vunpack.c.h.s8.bf16 %v818
    %v1063 = vunpack.c.l.s8.bf16 %v819
    %v1064 = vunpack.c.l.s8.bf16 %v820
    %v1065 = vunpack.c.l.s8.bf16 %v821
    %v1066 = vunpack.c.l.s8.bf16 %v822
    %v1067 = vunpack.c.l.s8.bf16 %v823
    %v1068 = vunpack.c.l.s8.bf16 %v824
    %v1069 = vunpack.c.l.s8.bf16 %v825
    %v1070 = vunpack.c.l.s8.bf16 %v826
    %v1071 = vunpack.c.h.s8.bf16 %v819
    %v1072 = vunpack.c.h.s8.bf16 %v820
    %v1073 = vunpack.c.h.s8.bf16 %v821
    %v1074 = vunpack.c.h.s8.bf16 %v822
    %v1075 = vunpack.c.h.s8.bf16 %v823
    %v1076 = vunpack.c.h.s8.bf16 %v824
    %v1077 = vunpack.c.h.s8.bf16 %v825
    %v1078 = vunpack.c.h.s8.bf16 %v826
    %v1079 = vunpack.c.l.s8.bf16 %v827
    %v1080 = vunpack.c.l.s8.bf16 %v828
    %v1081 = vunpack.c.l.s8.bf16 %v829
    %v1082 = vunpack.c.l.s8.bf16 %v830
    %v1083 = vunpack.c.l.s8.bf16 %v831
    %v1084 = vunpack.c.l.s8.bf16 %v832
    %v1085 = vunpack.c.l.s8.bf16 %v833
    %v1086 = vunpack.c.l.s8.bf16 %v834
    %v1087 = vunpack.c.h.s8.bf16 %v827
    %v1088 = vunpack.c.h.s8.bf16 %v828
    %v1089 = vunpack.c.h.s8.bf16 %v829
    %v1090 = vunpack.c.h.s8.bf16 %v830
    %v1091 = vunpack.c.h.s8.bf16 %v831
    %v1092 = vunpack.c.h.s8.bf16 %v832
    %v1093 = vunpack.c.h.s8.bf16 %v833
    %v1094 = vunpack.c.h.s8.bf16 %v834
    %1095 = vmatprep.subr.bf16.mxu0 %v840
    %1096 = vmatpush1.bf16.msra.mxu0 %v839
    %1097 = vmatprep.subr.bf16.mxu0 %v848
    %1098 = vmatpush1.bf16.msra.mxu0 %v847
    %1099 = vmatprep.subr.bf16.mxu0 %v856
    %1100 = vmatpush1.bf16.msra.mxu0 %v855
    %1101 = vmatprep.subr.bf16.mxu0 %v864
    %1102 = vmatpush1.bf16.msra.mxu0 %v863
    %1103 = vmatprep.subr.bf16.mxu0 %v872
    %1104 = vmatpush1.bf16.msra.mxu0 %v871
    %1105 = vmatprep.subr.bf16.mxu0 %v880
    %1106 = vmatpush1.bf16.msra.mxu0 %v879
    %1107 = vmatprep.subr.bf16.mxu0 %v888
    %1108 = vmatpush1.bf16.msra.mxu0 %v887
    %1109 = vmatprep.subr.bf16.mxu0 %v896
    %1110 = vmatpush1.bf16.msra.mxu0 %v895
    %1111 = vmatprep.subr.bf16.mxu0 %v904
    %1112 = vmatpush1.bf16.msra.mxu0 %v903
    %1113 = vmatprep.subr.bf16.mxu0 %v912
    %1114 = vmatpush1.bf16.msra.mxu0 %v911
    %1115 = vmatprep.subr.bf16.mxu0 %v920
    %1116 = vmatpush1.bf16.msra.mxu0 %v919
    %1117 = vmatprep.subr.bf16.mxu0 %v928
    %1118 = vmatpush1.bf16.msra.mxu0 %v927
    %1119 = vmatprep.subr.bf16.mxu0 %v936
    %1120 = vmatpush1.bf16.msra.mxu0 %v935
    %1121 = vmatprep.subr.bf16.mxu0 %v944
    %1122 = vmatpush1.bf16.msra.mxu0 %v943
    %1123 = vmatprep.subr.bf16.mxu0 %v952
    %1124 = vmatpush1.bf16.msra.mxu0 %v951
    %1125 = vmatprep.subr.bf16.mxu0 %v960
    %1126 = vmatpush1.bf16.msra.mxu0 %v959
    %1127 = vmatprep.mubr.bf16.mxu0 %v836
    %1128 = vmatmul.mubr.bf16.gmra.mrb[0].mxu0 %v835
    %v1129 = vpop.f32.mrb[0].mxu0
    %v1130 = vadd.f32 0.0, %v1129
    %v1131 = vpop.f32.mrb[0].mxu0
    %v1132 = vadd.f32 0.0, %v1131
    %v1133 = vpop.f32.mrb[0].mxu0
    %v1134 = vpop.f32.mrb[0].mxu0
    %1135 = vdwg.mxu0
    %1136 = vmatprep.subr.bf16.mxu0 %v968
    %1137 = vmatpush1.bf16.msra.mxu0 %v967
    %1138 = vmatprep.subr.bf16.mxu0 %v976
    %1139 = vmatpush1.bf16.msra.mxu0 %v975
    %1140 = vmatprep.subr.bf16.mxu0 %v984
    %1141 = vmatpush1.bf16.msra.mxu0 %v983
    %1142 = vmatprep.subr.bf16.mxu0 %v992
    %1143 = vmatpush1.bf16.msra.mxu0 %v991
    %1144 = vmatprep.subr.bf16.mxu0 %v1000
    %1145 = vmatpush1.bf16.msra.mxu0 %v999
    %1146 = vmatprep.subr.bf16.mxu0 %v1008
    %1147 = vmatpush1.bf16.msra.mxu0 %v1007
    %1148 = vmatprep.subr.bf16.mxu0 %v1016
    %1149 = vmatpush1.bf16.msra.mxu0 %v1015
    %1150 = vmatprep.subr.bf16.mxu0 %v1024
    %1151 = vmatpush1.bf16.msra.mxu0 %v1023
    %1152 = vmatprep.subr.bf16.mxu0 %v1032
    %1153 = vmatpush1.bf16.msra.mxu0 %v1031
    %1154 = vmatprep.subr.bf16.mxu0 %v1040
    %1155 = vmatpush1.bf16.msra.mxu0 %v1039
    %1156 = vmatprep.subr.bf16.mxu0 %v1048
    %1157 = vmatpush1.bf16.msra.mxu0 %v1047
    %1158 = vmatprep.subr.bf16.mxu0 %v1056
    %1159 = vmatpush1.bf16.msra.mxu0 %v1055
    %1160 = vmatprep.subr.bf16.mxu0 %v1064
    %1161 = vmatpush1.bf16.msra.mxu0 %v1063
    %1162 = vmatprep.subr.bf16.mxu0 %v1072
    %1163 = vmatpush1.bf16.msra.mxu0 %v1071
    %1164 = vmatprep.subr.bf16.mxu0 %v1080
    %1165 = vmatpush1.bf16.msra.mxu0 %v1079
    %1166 = vmatprep.subr.bf16.mxu0 %v1088
    %1167 = vmatpush1.bf16.msra.mxu0 %v1087
    %1168 = vmatprep.mubr.bf16.mxu0 %v838
    %1169 = vmatmul.mubr.bf16.gmra.mrb[0].mxu0 %v837
    %v1170 = vpop.f32.mrb[0].mxu0
    %v1171 = vadd.f32 %v1130, %v1170
    %v1172 = vpop.f32.mrb[0].mxu0
    %v1173 = vadd.f32 %v1132, %v1172
    %v1174 = vpop.f32.mrb[0].mxu0
    %v1175 = vpop.f32.mrb[0].mxu0
    %1176 = vdwg.mxu0
    %1177 = vmatprep.subr.bf16.mxu0 %v842
    %1178 = vmatpush1.bf16.msra.mxu0 %v841
    %1179 = vmatprep.subr.bf16.mxu0 %v850
    %1180 = vmatpush1.bf16.msra.mxu0 %v849
    %1181 = vmatprep.subr.bf16.mxu0 %v858
    %1182 = vmatpush1.bf16.msra.mxu0 %v857
    %1183 = vmatprep.subr.bf16.mxu0 %v866
    %1184 = vmatpush1.bf16.msra.mxu0 %v865
    %1185 = vmatprep.subr.bf16.mxu0 %v874
    %1186 = vmatpush1.bf16.msra.mxu0 %v873
    %1187 = vmatprep.subr.bf16.mxu0 %v882
    %1188 = vmatpush1.bf16.msra.mxu0 %v881
    %1189 = vmatprep.subr.bf16.mxu0 %v890
    %1190 = vmatpush1.bf16.msra.mxu0 %v889
    %1191 = vmatprep.subr.bf16.mxu0 %v898
    %1192 = vmatpush1.bf16.msra.mxu0 %v897
    %1193 = vmatprep.subr.bf16.mxu0 %v906
    %1194 = vmatpush1.bf16.msra.mxu0 %v905
    %1195 = vmatprep.subr.bf16.mxu0 %v914
    %1196 = vmatpush1.bf16.msra.mxu0 %v913
    %1197 = vmatprep.subr.bf16.mxu0 %v922
    %1198 = vmatpush1.bf16.msra.mxu0 %v921
    %1199 = vmatprep.subr.bf16.mxu0 %v930
    %1200 = vmatpush1.bf16.msra.mxu0 %v929
    %1201 = vmatprep.subr.bf16.mxu0 %v938
    %1202 = vmatpush1.bf16.msra.mxu0 %v937
    %1203 = vmatprep.subr.bf16.mxu0 %v946
    %1204 = vmatpush1.bf16.msra.mxu0 %v945
    %1205 = vmatprep.subr.bf16.mxu0 %v954
    %1206 = vmatpush1.bf16.msra.mxu0 %v953
    %1207 = vmatprep.subr.bf16.mxu0 %v962
    %1208 = vmatpush1.bf16.msra.mxu0 %v961
    %1209 = vmatprep.mubr.bf16.mxu0 %v836
    %1210 = vmatmul.mubr.bf16.gmra.mrb[0].mxu0 %v835
    %v1211 = vpop.f32.mrb[0].mxu0
    %v1212 = vadd.f32 0.0, %v1211
    %v1213 = vpop.f32.mrb[0].mxu0
    %v1214 = vadd.f32 0.0, %v1213
    %v1215 = vpop.f32.mrb[0].mxu0
    %v1216 = vpop.f32.mrb[0].mxu0
    %1217 = vdwg.mxu0
    %1218 = vmatprep.subr.bf16.mxu0 %v970
    %1219 = vmatpush1.bf16.msra.mxu0 %v969
    %1220 = vmatprep.subr.bf16.mxu0 %v978
    %1221 = vmatpush1.bf16.msra.mxu0 %v977
    %1222 = vmatprep.subr.bf16.mxu0 %v986
    %1223 = vmatpush1.bf16.msra.mxu0 %v985
    %1224 = vmatprep.subr.bf16.mxu0 %v994
    %1225 = vmatpush1.bf16.msra.mxu0 %v993
    %1226 = vmatprep.subr.bf16.mxu0 %v1002
    %1227 = vmatpush1.bf16.msra.mxu0 %v1001
    %1228 = vmatprep.subr.bf16.mxu0 %v1010
    %1229 = vmatpush1.bf16.msra.mxu0 %v1009
    %1230 = vmatprep.subr.bf16.mxu0 %v1018
    %1231 = vmatpush1.bf16.msra.mxu0 %v1017
    %1232 = vmatprep.subr.bf16.mxu0 %v1026
    %1233 = vmatpush1.bf16.msra.mxu0 %v1025
    %1234 = vmatprep.subr.bf16.mxu0 %v1034
    %1235 = vmatpush1.bf16.msra.mxu0 %v1033
    %1236 = vmatprep.subr.bf16.mxu0 %v1042
    %1237 = vmatpush1.bf16.msra.mxu0 %v1041
    %1238 = vmatprep.subr.bf16.mxu0 %v1050
    %1239 = vmatpush1.bf16.msra.mxu0 %v1049
    %1240 = vmatprep.subr.bf16.mxu0 %v1058
    %1241 = vmatpush1.bf16.msra.mxu0 %v1057
    %1242 = vmatprep.subr.bf16.mxu0 %v1066
    %1243 = vmatpush1.bf16.msra.mxu0 %v1065
    %1244 = vmatprep.subr.bf16.mxu0 %v1074
    %1245 = vmatpush1.bf16.msra.mxu0 %v1073
    %1246 = vmatprep.subr.bf16.mxu0 %v1082
    %1247 = vmatpush1.bf16.msra.mxu0 %v1081
    %1248 = vmatprep.subr.bf16.mxu0 %v1090
    %1249 = vmatpush1.bf16.msra.mxu0 %v1089
    %1250 = vmatprep.mubr.bf16.mxu0 %v838
    %1251 = vmatmul.mubr.bf16.gmra.mrb[0].mxu0 %v837
    %v1252 = vpop.f32.mrb[0].mxu0
    %v1253 = vadd.f32 %v1212, %v1252
    %v1254 = vpop.f32.mrb[0].mxu0
    %v1255 = vadd.f32 %v1214, %v1254
    %v1256 = vpop.f32.mrb[0].mxu0
    %v1257 = vpop.f32.mrb[0].mxu0
    %1258 = vdwg.mxu0
    %1259 = vmatprep.subr.bf16.mxu0 %v844
    %1260 = vmatpush1.bf16.msra.mxu0 %v843
    %1261 = vmatprep.subr.bf16.mxu0 %v852
    %1262 = vmatpush1.bf16.msra.mxu0 %v851
    %1263 = vmatprep.subr.bf16.mxu0 %v860
    %1264 = vmatpush1.bf16.msra.mxu0 %v859
    %1265 = vmatprep.subr.bf16.mxu0 %v868
    %1266 = vmatpush1.bf16.msra.mxu0 %v867
    %1267 = vmatprep.subr.bf16.mxu0 %v876
    %1268 = vmatpush1.bf16.msra.mxu0 %v875
    %1269 = vmatprep.subr.bf16.mxu0 %v884
    %1270 = vmatpush1.bf16.msra.mxu0 %v883
    %1271 = vmatprep.subr.bf16.mxu0 %v892
    %1272 = vmatpush1.bf16.msra.mxu0 %v891
    %1273 = vmatprep.subr.bf16.mxu0 %v900
    %1274 = vmatpush1.bf16.msra.mxu0 %v899
    %1275 = vmatprep.subr.bf16.mxu0 %v908
    %1276 = vmatpush1.bf16.msra.mxu0 %v907
    %1277 = vmatprep.subr.bf16.mxu0 %v916
    %1278 = vmatpush1.bf16.msra.mxu0 %v915
    %1279 = vmatprep.subr.bf16.mxu0 %v924
    %1280 = vmatpush1.bf16.msra.mxu0 %v923
    %1281 = vmatprep.subr.bf16.mxu0 %v932
    %1282 = vmatpush1.bf16.msra.mxu0 %v931
    %1283 = vmatprep.subr.bf16.mxu0 %v940
    %1284 = vmatpush1.bf16.msra.mxu0 %v939
    %1285 = vmatprep.subr.bf16.mxu0 %v948
    %1286 = vmatpush1.bf16.msra.mxu0 %v947
    %1287 = vmatprep.subr.bf16.mxu0 %v956
    %1288 = vmatpush1.bf16.msra.mxu0 %v955
    %1289 = vmatprep.subr.bf16.mxu0 %v964
    %1290 = vmatpush1.bf16.msra.mxu0 %v963
    %1291 = vmatprep.mubr.bf16.mxu0 %v836
    %1292 = vmatmul.mubr.bf16.gmra.mrb[0].mxu0 %v835
    %v1293 = vpop.f32.mrb[0].mxu0
    %v1294 = vadd.f32 0.0, %v1293
    %v1295 = vpop.f32.mrb[0].mxu0
    %v1296 = vadd.f32 0.0, %v1295
    %v1297 = vpop.f32.mrb[0].mxu0
    %v1298 = vpop.f32.mrb[0].mxu0
    %1299 = vdwg.mxu0
    %1300 = vmatprep.subr.bf16.mxu0 %v972
    %1301 = vmatpush1.bf16.msra.mxu0 %v971
    %1302 = vmatprep.subr.bf16.mxu0 %v980
    %1303 = vmatpush1.bf16.msra.mxu0 %v979
    %1304 = vmatprep.subr.bf16.mxu0 %v988
    %1305 = vmatpush1.bf16.msra.mxu0 %v987
    %1306 = vmatprep.subr.bf16.mxu0 %v996
    %1307 = vmatpush1.bf16.msra.mxu0 %v995
    %1308 = vmatprep.subr.bf16.mxu0 %v1004
    %1309 = vmatpush1.bf16.msra.mxu0 %v1003
    %1310 = vmatprep.subr.bf16.mxu0 %v1012
    %1311 = vmatpush1.bf16.msra.mxu0 %v1011
    %1312 = vmatprep.subr.bf16.mxu0 %v1020
    %1313 = vmatpush1.bf16.msra.mxu0 %v1019
    %1314 = vmatprep.subr.bf16.mxu0 %v1028
    %1315 = vmatpush1.bf16.msra.mxu0 %v1027
    %1316 = vmatprep.subr.bf16.mxu0 %v1036
    %1317 = vmatpush1.bf16.msra.mxu0 %v1035
    %1318 = vmatprep.subr.bf16.mxu0 %v1044
    %1319 = vmatpush1.bf16.msra.mxu0 %v1043
    %1320 = vmatprep.subr.bf16.mxu0 %v1052
    %1321 = vmatpush1.bf16.msra.mxu0 %v1051
    %1322 = vmatprep.subr.bf16.mxu0 %v1060
    %1323 = vmatpush1.bf16.msra.mxu0 %v1059
    %1324 = vmatprep.subr.bf16.mxu0 %v1068
    %1325 = vmatpush1.bf16.msra.mxu0 %v1067
    %1326 = vmatprep.subr.bf16.mxu0 %v1076
    %1327 = vmatpush1.bf16.msra.mxu0 %v1075
    %1328 = vmatprep.subr.bf16.mxu0 %v1084
    %1329 = vmatpush1.bf16.msra.mxu0 %v1083
    %1330 = vmatprep.subr.bf16.mxu0 %v1092
    %1331 = vmatpush1.bf16.msra.mxu0 %v1091
    %1332 = vmatprep.mubr.bf16.mxu0 %v838
    %1333 = vmatmul.mubr.bf16.gmra.mrb[0].mxu0 %v837
    %v1334 = vpop.f32.mrb[0].mxu0
    %v1335 = vadd.f32 %v1294, %v1334
    %v1336 = vpop.f32.mrb[0].mxu0
    %v1337 = vadd.f32 %v1296, %v1336
    %v1338 = vpop.f32.mrb[0].mxu0
    %v1339 = vpop.f32.mrb[0].mxu0
    %1340 = vdwg.mxu0
    %1341 = vmatprep.subr.bf16.mxu0 %v846
    %1342 = vmatpush1.bf16.msra.mxu0 %v845
    %1343 = vmatprep.subr.bf16.mxu0 %v854
    %1344 = vmatpush1.bf16.msra.mxu0 %v853
    %1345 = vmatprep.subr.bf16.mxu0 %v862
    %1346 = vmatpush1.bf16.msra.mxu0 %v861
    %1347 = vmatprep.subr.bf16.mxu0 %v870
    %1348 = vmatpush1.bf16.msra.mxu0 %v869
    %1349 = vmatprep.subr.bf16.mxu0 %v878
    %1350 = vmatpush1.bf16.msra.mxu0 %v877
    %1351 = vmatprep.subr.bf16.mxu0 %v886
    %1352 = vmatpush1.bf16.msra.mxu0 %v885
    %1353 = vmatprep.subr.bf16.mxu0 %v894
    %1354 = vmatpush1.bf16.msra.mxu0 %v893
    %1355 = vmatprep.subr.bf16.mxu0 %v902
    %1356 = vmatpush1.bf16.msra.mxu0 %v901
    %1357 = vmatprep.subr.bf16.mxu0 %v910
    %1358 = vmatpush1.bf16.msra.mxu0 %v909
    %1359 = vmatprep.subr.bf16.mxu0 %v918
    %1360 = vmatpush1.bf16.msra.mxu0 %v917
    %1361 = vmatprep.subr.bf16.mxu0 %v926
    %1362 = vmatpush1.bf16.msra.mxu0 %v925
    %1363 = vmatprep.subr.bf16.mxu0 %v934
    %1364 = vmatpush1.bf16.msra.mxu0 %v933
    %1365 = vmatprep.subr.bf16.mxu0 %v942
    %1366 = vmatpush1.bf16.msra.mxu0 %v941
    %1367 = vmatprep.subr.bf16.mxu0 %v950
    %1368 = vmatpush1.bf16.msra.mxu0 %v949
    %1369 = vmatprep.subr.bf16.mxu0 %v958
    %1370 = vmatpush1.bf16.msra.mxu0 %v957
    %1371 = vmatprep.subr.bf16.mxu0 %v966
    %1372 = vmatpush1.bf16.msra.mxu0 %v965
    %1373 = vmatprep.mubr.bf16.mxu0 %v836
    %1374 = vmatmul.mubr.bf16.gmra.mrb[0].mxu0 %v835
    %v1375 = vpop.f32.mrb[0].mxu0
    %v1376 = vadd.f32 0.0, %v1375
    %v1377 = vpop.f32.mrb[0].mxu0
    %v1378 = vadd.f32 0.0, %v1377
    %v1379 = vpop.f32.mrb[0].mxu0
    %v1380 = vpop.f32.mrb[0].mxu0
    %1381 = vdwg.mxu0
    %1382 = vmatprep.subr.bf16.mxu0 %v974
    %1383 = vmatpush1.bf16.msra.mxu0 %v973
    %1384 = vmatprep.subr.bf16.mxu0 %v982
    %1385 = vmatpush1.bf16.msra.mxu0 %v981
    %1386 = vmatprep.subr.bf16.mxu0 %v990
    %1387 = vmatpush1.bf16.msra.mxu0 %v989
    %1388 = vmatprep.subr.bf16.mxu0 %v998
    %1389 = vmatpush1.bf16.msra.mxu0 %v997
    %1390 = vmatprep.subr.bf16.mxu0 %v1006
    %1391 = vmatpush1.bf16.msra.mxu0 %v1005
    %1392 = vmatprep.subr.bf16.mxu0 %v1014
    %1393 = vmatpush1.bf16.msra.mxu0 %v1013
    %1394 = vmatprep.subr.bf16.mxu0 %v1022
    %1395 = vmatpush1.bf16.msra.mxu0 %v1021
    %1396 = vmatprep.subr.bf16.mxu0 %v1030
    %1397 = vmatpush1.bf16.msra.mxu0 %v1029
    %1398 = vmatprep.subr.bf16.mxu0 %v1038
    %1399 = vmatpush1.bf16.msra.mxu0 %v1037
    %1400 = vmatprep.subr.bf16.mxu0 %v1046
    %1401 = vmatpush1.bf16.msra.mxu0 %v1045
    %1402 = vmatprep.subr.bf16.mxu0 %v1054
    %1403 = vmatpush1.bf16.msra.mxu0 %v1053
    %1404 = vmatprep.subr.bf16.mxu0 %v1062
    %1405 = vmatpush1.bf16.msra.mxu0 %v1061
    %1406 = vmatprep.subr.bf16.mxu0 %v1070
    %1407 = vmatpush1.bf16.msra.mxu0 %v1069
    %1408 = vmatprep.subr.bf16.mxu0 %v1078
    %1409 = vmatpush1.bf16.msra.mxu0 %v1077
    %1410 = vmatprep.subr.bf16.mxu0 %v1086
    %1411 = vmatpush1.bf16.msra.mxu0 %v1085
    %1412 = vmatprep.subr.bf16.mxu0 %v1094
    %1413 = vmatpush1.bf16.msra.mxu0 %v1093
    %1414 = vmatprep.mubr.bf16.mxu0 %v838
    %1415 = vmatmul.mubr.bf16.gmra.mrb[0].mxu0 %v837
    %v1416 = vpop.f32.mrb[0].mxu0
    %v1417 = vadd.f32 %v1376, %v1416
    %v1418 = vpop.f32.mrb[0].mxu0
    %v1419 = vadd.f32 %v1378, %v1418
    %v1420 = vpop.f32.mrb[0].mxu0
    %v1421 = vpop.f32.mrb[0].mxu0
    %1422 = vdwg.mxu0
    %v1423 = vld [vmem:[#allocation13 + $0x25] sm:$0xff]
    %v1425 = vlaneseq
    %v1426 = vshrl.u32 %v1425, 7
    %v1427 = vsub.s32 0, %v1426
    %v1428 = vrot.slane %v1423, %v1427
    %v1429 = vlaneseq
    %v1430 = vshrl.u32 %v1429, 7
    %v1431 = vsub.s32 1, %v1430
    %v1432 = vrot.slane %v1423, %v1431
    %v1433 = vlaneseq
    %v1434 = vshrl.u32 %v1433, 7
    %v1435 = vsub.s32 2, %v1434
    %v1436 = vrot.slane %v1423, %v1435
    %v1437 = vlaneseq
    %v1438 = vshrl.u32 %v1437, 7
    %v1439 = vsub.s32 3, %v1438
    %v1440 = vrot.slane %v1423, %v1439
    %v1441 = vlaneseq
    %v1442 = vshrl.u32 %v1441, 7
    %v1443 = vsub.s32 4, %v1442
    %v1444 = vrot.slane %v1423, %v1443
    %v1445 = vlaneseq
    %v1446 = vshrl.u32 %v1445, 7
    %v1447 = vsub.s32 5, %v1446
    %v1448 = vrot.slane %v1423, %v1447
    %v1449 = vlaneseq
    %v1450 = vshrl.u32 %v1449, 7
    %v1451 = vsub.s32 6, %v1450
    %v1452 = vrot.slane %v1423, %v1451
    %v1453 = vlaneseq
    %v1454 = vshrl.u32 %v1453, 7
    %v1455 = vsub.s32 7, %v1454
    %v1456 = vrot.slane %v1423, %v1455
    %v1465 = vmul.f32 %v1171, %v1428
    %v1466 = vmul.f32 %v1173, %v1432
    %v1467 = vmul.f32 %v1253, %v1436
    %v1468 = vmul.f32 %v1255, %v1440
    %v1469 = vmul.f32 %v1335, %v1444
    %v1470 = vmul.f32 %v1337, %v1448
    %v1471 = vmul.f32 %v1417, %v1452
    %v1472 = vmul.f32 %v1419, %v1456
    %v1473 = vld [vmem:[#allocation13 + $0x15] sm:$0xff]
    %v1474 = vld [vmem:[#allocation13 + $0x1d] sm:$0xff]
    %v1475 = vrot.slane %v1465, 4
    %v1476 = vadd.f32 %v1465, %v1475
    %v1477 = vrot.slane %v1476, 2
    %v1478 = vadd.f32 %v1476, %v1477
    %v1479 = vrot.slane %v1478, 1
    %v1480 = vadd.f32 %v1478, %v1479
    %v1481 = vrot.slane %v1466, 4
    %v1482 = vadd.f32 %v1466, %v1481
    %v1483 = vrot.slane %v1482, 2
    %v1484 = vadd.f32 %v1482, %v1483
    %v1485 = vrot.slane %v1484, 1
    %v1486 = vadd.f32 %v1484, %v1485
    %v1487 = vrot.slane %v1467, 4
    %v1488 = vadd.f32 %v1467, %v1487
    %v1489 = vrot.slane %v1488, 2
    %v1490 = vadd.f32 %v1488, %v1489
    %v1491 = vrot.slane %v1490, 1
    %v1492 = vadd.f32 %v1490, %v1491
    %v1493 = vrot.slane %v1468, 4
    %v1494 = vadd.f32 %v1468, %v1493
    %v1495 = vrot.slane %v1494, 2
    %v1496 = vadd.f32 %v1494, %v1495
    %v1497 = vrot.slane %v1496, 1
    %v1498 = vadd.f32 %v1496, %v1497
    %v1499 = vrot.slane %v1469, 4
    %v1500 = vadd.f32 %v1469, %v1499
    %v1501 = vrot.slane %v1500, 2
    %v1502 = vadd.f32 %v1500, %v1501
    %v1503 = vrot.slane %v1502, 1
    %v1504 = vadd.f32 %v1502, %v1503
    %v1505 = vrot.slane %v1470, 4
    %v1506 = vadd.f32 %v1470, %v1505
    %v1507 = vrot.slane %v1506, 2
    %v1508 = vadd.f32 %v1506, %v1507
    %v1509 = vrot.slane %v1508, 1
    %v1510 = vadd.f32 %v1508, %v1509
    %v1511 = vrot.slane %v1471, 4
    %v1512 = vadd.f32 %v1471, %v1511
    %v1513 = vrot.slane %v1512, 2
    %v1514 = vadd.f32 %v1512, %v1513
    %v1515 = vrot.slane %v1514, 1
    %v1516 = vadd.f32 %v1514, %v1515
    %v1517 = vrot.slane %v1472, 4
    %v1518 = vadd.f32 %v1472, %v1517
    %v1519 = vrot.slane %v1518, 2
    %v1520 = vadd.f32 %v1518, %v1519
    %v1521 = vrot.slane %v1520, 1
    %v1522 = vadd.f32 %v1520, %v1521
    %v1523 = vmul.f32 %v1480, %v284
    %v1524 = vmul.f32 %v1486, %v284
    %v1525 = vmul.f32 %v1492, %v284
    %v1526 = vmul.f32 %v1498, %v284
    %v1527 = vmul.f32 %v1504, %v284
    %v1528 = vmul.f32 %v1510, %v284
    %v1529 = vmul.f32 %v1516, %v284
    %v1530 = vmul.f32 %v1522, %v284
    %v1531 = vsub.f32 %v1465, %v1523
    %v1532 = vsub.f32 %v1466, %v1524
    %v1533 = vsub.f32 %v1467, %v1525
    %v1534 = vsub.f32 %v1468, %v1526
    %v1535 = vsub.f32 %v1469, %v1527
    %v1536 = vsub.f32 %v1470, %v1528
    %v1537 = vsub.f32 %v1471, %v1529
    %v1538 = vsub.f32 %v1472, %v1530
    %v1539 = vmul.f32 %v1531, %v1531
    %v1540 = vmul.f32 %v1532, %v1532
    %v1541 = vmul.f32 %v1533, %v1533
    %v1542 = vmul.f32 %v1534, %v1534
    %v1543 = vmul.f32 %v1535, %v1535
    %v1544 = vmul.f32 %v1536, %v1536
    %v1545 = vmul.f32 %v1537, %v1537
    %v1546 = vmul.f32 %v1538, %v1538
    %v1547 = vrot.slane %v1539, 4
    %v1548 = vadd.f32 %v1539, %v1547
    %v1549 = vrot.slane %v1548, 2
    %v1550 = vadd.f32 %v1548, %v1549
    %v1551 = vrot.slane %v1550, 1
    %v1552 = vadd.f32 %v1550, %v1551
    %v1553 = vrot.slane %v1540, 4
    %v1554 = vadd.f32 %v1540, %v1553
    %v1555 = vrot.slane %v1554, 2
    %v1556 = vadd.f32 %v1554, %v1555
    %v1557 = vrot.slane %v1556, 1
    %v1558 = vadd.f32 %v1556, %v1557
    %v1559 = vrot.slane %v1541, 4
    %v1560 = vadd.f32 %v1541, %v1559
    %v1561 = vrot.slane %v1560, 2
    %v1562 = vadd.f32 %v1560, %v1561
    %v1563 = vrot.slane %v1562, 1
    %v1564 = vadd.f32 %v1562, %v1563
    %v1565 = vrot.slane %v1542, 4
    %v1566 = vadd.f32 %v1542, %v1565
    %v1567 = vrot.slane %v1566, 2
    %v1568 = vadd.f32 %v1566, %v1567
    %v1569 = vrot.slane %v1568, 1
    %v1570 = vadd.f32 %v1568, %v1569
    %v1571 = vrot.slane %v1543, 4
    %v1572 = vadd.f32 %v1543, %v1571
    %v1573 = vrot.slane %v1572, 2
    %v1574 = vadd.f32 %v1572, %v1573
    %v1575 = vrot.slane %v1574, 1
    %v1576 = vadd.f32 %v1574, %v1575
    %v1577 = vrot.slane %v1544, 4
    %v1578 = vadd.f32 %v1544, %v1577
    %v1579 = vrot.slane %v1578, 2
    %v1580 = vadd.f32 %v1578, %v1579
    %v1581 = vrot.slane %v1580, 1
    %v1582 = vadd.f32 %v1580, %v1581
    %v1583 = vrot.slane %v1545, 4
    %v1584 = vadd.f32 %v1545, %v1583
    %v1585 = vrot.slane %v1584, 2
    %v1586 = vadd.f32 %v1584, %v1585
    %v1587 = vrot.slane %v1586, 1
    %v1588 = vadd.f32 %v1586, %v1587
    %v1589 = vrot.slane %v1546, 4
    %v1590 = vadd.f32 %v1546, %v1589
    %v1591 = vrot.slane %v1590, 2
    %v1592 = vadd.f32 %v1590, %v1591
    %v1593 = vrot.slane %v1592, 1
    %v1594 = vadd.f32 %v1592, %v1593
    %v1595 = vmul.f32 %v1552, %v284
    %v1596 = vmul.f32 %v1558, %v284
    %v1597 = vmul.f32 %v1564, %v284
    %v1598 = vmul.f32 %v1570, %v284
    %v1599 = vmul.f32 %v1576, %v284
    %v1600 = vmul.f32 %v1582, %v284
    %v1601 = vmul.f32 %v1588, %v284
    %v1602 = vmul.f32 %v1594, %v284
    %v1603 = vadd.f32 %v1595, 0.8
    %v1604 = vadd.f32 %v1596, 0.8
    %v1605 = vadd.f32 %v1597, 0.8
    %v1606 = vadd.f32 %v1598, 0.8
    %v1607 = vadd.f32 %v1599, 0.8
    %v1608 = vadd.f32 %v1600, 0.8
    %v1609 = vadd.f32 %v1601, 0.8
    %v1610 = vadd.f32 %v1602, 0.8
    %v1611 = vrsqrt.pop %v1603
    %v1612 = vrsqrt.pop %v1604
    %v1613 = vrsqrt.pop %v1605
    %v1614 = vrsqrt.pop %v1606
    %v1615 = vrsqrt.pop %v1607
    %v1616 = vrsqrt.pop %v1608
    %v1617 = vrsqrt.pop %v1609
    %v1618 = vrsqrt.pop %v1610
    %v1620 = vlaneseq
    %v1621 = vshrl.u32 %v1620, 7
    %v1622 = vsub.s32 0, %v1621
    %v1623 = vrot.slane %v1473, %v1622
    %v1624 = vlaneseq
    %v1625 = vshrl.u32 %v1624, 7
    %v1626 = vsub.s32 1, %v1625
    %v1627 = vrot.slane %v1473, %v1626
    %v1628 = vlaneseq
    %v1629 = vshrl.u32 %v1628, 7
    %v1630 = vsub.s32 2, %v1629
    %v1631 = vrot.slane %v1473, %v1630
    %v1632 = vlaneseq
    %v1633 = vshrl.u32 %v1632, 7
    %v1634 = vsub.s32 3, %v1633
    %v1635 = vrot.slane %v1473, %v1634
    %v1636 = vlaneseq
    %v1637 = vshrl.u32 %v1636, 7
    %v1638 = vsub.s32 4, %v1637
    %v1639 = vrot.slane %v1473, %v1638
    %v1640 = vlaneseq
    %v1641 = vshrl.u32 %v1640, 7
    %v1642 = vsub.s32 5, %v1641
    %v1643 = vrot.slane %v1473, %v1642
    %v1644 = vlaneseq
    %v1645 = vshrl.u32 %v1644, 7
    %v1646 = vsub.s32 6, %v1645
    %v1647 = vrot.slane %v1473, %v1646
    %v1648 = vlaneseq
    %v1649 = vshrl.u32 %v1648, 7
    %v1650 = vsub.s32 7, %v1649
    %v1651 = vrot.slane %v1473, %v1650
    %v1660 = vmul.f32 %v1611, %v1623
    %v1661 = vmul.f32 %v1612, %v1627
    %v1662 = vmul.f32 %v1613, %v1631
    %v1663 = vmul.f32 %v1614, %v1635
    %v1664 = vmul.f32 %v1615, %v1639
    %v1665 = vmul.f32 %v1616, %v1643
    %v1666 = vmul.f32 %v1617, %v1647
    %v1667 = vmul.f32 %v1618, %v1651
    %v1668 = vlaneseq
    %v1669 = vshrl.u32 %v1668, 7
    %v1670 = vsub.s32 0, %v1669
    %v1671 = vrot.slane %v1660, %v1670
    %v1672 = vlaneseq
    %v1673 = vshrl.u32 %v1672, 7
    %v1674 = vsub.s32 0, %v1673
    %v1675 = vrot.slane %v1661, %v1674
    %v1676 = vlaneseq
    %v1677 = vshrl.u32 %v1676, 7
    %v1678 = vsub.s32 0, %v1677
    %v1679 = vrot.slane %v1662, %v1678
    %v1680 = vlaneseq
    %v1681 = vshrl.u32 %v1680, 7
    %v1682 = vsub.s32 0, %v1681
    %v1683 = vrot.slane %v1663, %v1682
    %v1684 = vlaneseq
    %v1685 = vshrl.u32 %v1684, 7
    %v1686 = vsub.s32 0, %v1685
    %v1687 = vrot.slane %v1664, %v1686
    %v1688 = vlaneseq
    %v1689 = vshrl.u32 %v1688, 7
    %v1690 = vsub.s32 0, %v1689
    %v1691 = vrot.slane %v1665, %v1690
    %v1692 = vlaneseq
    %v1693 = vshrl.u32 %v1692, 7
    %v1694 = vsub.s32 0, %v1693
    %v1695 = vrot.slane %v1666, %v1694
    %v1696 = vlaneseq
    %v1697 = vshrl.u32 %v1696, 7
    %v1698 = vsub.s32 0, %v1697
    %v1699 = vrot.slane %v1667, %v1698
    %v1700 = vmul.f32 %v1531, %v1671
    %v1701 = vmul.f32 %v1532, %v1675
    %v1702 = vmul.f32 %v1533, %v1679
    %v1703 = vmul.f32 %v1534, %v1683
    %v1704 = vmul.f32 %v1535, %v1687
    %v1705 = vmul.f32 %v1536, %v1691
    %v1706 = vmul.f32 %v1537, %v1695
    %v1707 = vmul.f32 %v1538, %v1699
    %v1709 = vlaneseq
    %v1710 = vshrl.u32 %v1709, 7
    %v1711 = vsub.s32 0, %v1710
    %v1712 = vrot.slane %v1474, %v1711
    %v1713 = vlaneseq
    %v1714 = vshrl.u32 %v1713, 7
    %v1715 = vsub.s32 1, %v1714
    %v1716 = vrot.slane %v1474, %v1715
    %v1717 = vlaneseq
    %v1718 = vshrl.u32 %v1717, 7
    %v1719 = vsub.s32 2, %v1718
    %v1720 = vrot.slane %v1474, %v1719
    %v1721 = vlaneseq
    %v1722 = vshrl.u32 %v1721, 7
    %v1723 = vsub.s32 3, %v1722
    %v1724 = vrot.slane %v1474, %v1723
    %v1725 = vlaneseq
    %v1726 = vshrl.u32 %v1725, 7
    %v1727 = vsub.s32 4, %v1726
    %v1728 = vrot.slane %v1474, %v1727
    %v1729 = vlaneseq
    %v1730 = vshrl.u32 %v1729, 7
    %v1731 = vsub.s32 5, %v1730
    %v1732 = vrot.slane %v1474, %v1731
    %v1733 = vlaneseq
    %v1734 = vshrl.u32 %v1733, 7
    %v1735 = vsub.s32 6, %v1734
    %v1736 = vrot.slane %v1474, %v1735
    %v1737 = vlaneseq
    %v1738 = vshrl.u32 %v1737, 7
    %v1739 = vsub.s32 7, %v1738
    %v1740 = vrot.slane %v1474, %v1739
    %v1749 = vadd.f32 %v1700, %v1712
    %v1750 = vadd.f32 %v1701, %v1716
    %v1751 = vadd.f32 %v1702, %v1720
    %v1752 = vadd.f32 %v1703, %v1724
    %v1753 = vadd.f32 %v1704, %v1728
    %v1754 = vadd.f32 %v1705, %v1732
    %v1755 = vadd.f32 %v1706, %v1736
    %v1756 = vadd.f32 %v1707, %v1740
    %v1757 = vmul.f32 %v1749, 0.2
    %v1758 = vmul.f32 %v1750, 0.2
    %v1759 = vmul.f32 %v1751, 0.2
    %v1760 = vmul.f32 %v1752, 0.2
    %v1761 = vmul.f32 %v1753, 0.2
    %v1762 = vmul.f32 %v1754, 0.2
    %v1763 = vmul.f32 %v1755, 0.2
    %v1764 = vmul.f32 %v1756, 0.2
    %v1765 = vmax.f32 %v1749, %v1757
    %v1766 = vmax.f32 %v1750, %v1758
    %v1767 = vmax.f32 %v1751, %v1759
    %v1768 = vmax.f32 %v1752, %v1760
    %v1769 = vmax.f32 %v1753, %v1761
    %v1770 = vmax.f32 %v1754, %v1762
    %v1771 = vmax.f32 %v1755, %v1763
    %v1772 = vmax.f32 %v1756, %v1764
    %v1773 = vld [vmem:[#allocation11] sm:$0xff]
    %v1774 = vld [vmem:[#allocation11 + $0x8] sm:$0xff]
    %v1775 = vld [vmem:[#allocation11 + $0x10] sm:$0xff]
    %v1776 = vld [vmem:[#allocation11 + $0x18] sm:$0xff]
    %v1777 = vld [vmem:[#allocation11 + $0x20] sm:$0xff]
    %v1778 = vld [vmem:[#allocation11 + $0x28] sm:$0xff]
    %v1779 = vld [vmem:[#allocation11 + $0x30] sm:$0xff]
    %v1780 = vld [vmem:[#allocation11 + $0x38] sm:$0xff]
    %v1781 = vld [vmem:[#allocation11 + $0x40] sm:$0xff]
    %v1782 = vld [vmem:[#allocation11 + $0x48] sm:$0xff]
    %v1783 = vld [vmem:[#allocation11 + $0x50] sm:$0xff]
    %v1784 = vld [vmem:[#allocation11 + $0x58] sm:$0xff]
    %v1785 = vld [vmem:[#allocation11 + $0x60] sm:$0xff]
    %v1786 = vld [vmem:[#allocation11 + $0x68] sm:$0xff]
    %v1787 = vld [vmem:[#allocation11 + $0x70] sm:$0xff]
    %v1788 = vld [vmem:[#allocation11 + $0x78] sm:$0xff]
    %v1789 = vld [vmem:[#allocation11 + $0x80] sm:$0xff]
    %v1790 = vld [vmem:[#allocation11 + $0x88] sm:$0xff]
    %v1791 = vld [vmem:[#allocation11 + $0x90] sm:$0xff]
    %v1792 = vld [vmem:[#allocation11 + $0x98] sm:$0xff]
    %v1793 = vld [vmem:[#allocation11 + $0xa0] sm:$0xff]
    %v1794 = vld [vmem:[#allocation11 + $0xa8] sm:$0xff]
    %v1795 = vld [vmem:[#allocation11 + $0xb0] sm:$0xff]
    %v1796 = vld [vmem:[#allocation11 + $0xb8] sm:$0xff]
    %v1797 = vld [vmem:[#allocation11 + $0xc0] sm:$0xff]
    %v1798 = vld [vmem:[#allocation11 + $0xc8] sm:$0xff]
    %v1799 = vld [vmem:[#allocation11 + $0xd0] sm:$0xff]
    %v1800 = vld [vmem:[#allocation11 + $0xd8] sm:$0xff]
    %v1801 = vld [vmem:[#allocation11 + $0xe0] sm:$0xff]
    %v1802 = vld [vmem:[#allocation11 + $0xe8] sm:$0xff]
    %v1803 = vld [vmem:[#allocation11 + $0xf0] sm:$0xff]
    %v1804 = vld [vmem:[#allocation11 + $0xf8] sm:$0xff]
    %v1805 = vld [vmem:[#allocation11 + $0x100] sm:$0xff]
    %v1806 = vld [vmem:[#allocation11 + $0x108] sm:$0xff]
    %v1807 = vld [vmem:[#allocation11 + $0x110] sm:$0xff]
    %v1808 = vld [vmem:[#allocation11 + $0x118] sm:$0xff]
    %v1809 = vld [vmem:[#allocation11 + $0x120] sm:$0xff]
    %v1810 = vld [vmem:[#allocation11 + $0x128] sm:$0xff]
    %v1811 = vld [vmem:[#allocation11 + $0x130] sm:$0xff]
    %v1812 = vld [vmem:[#allocation11 + $0x138] sm:$0xff]
    %v1813 = vld [vmem:[#allocation11 + $0x140] sm:$0xff]
    %v1814 = vld [vmem:[#allocation11 + $0x148] sm:$0xff]
    %v1815 = vld [vmem:[#allocation11 + $0x150] sm:$0xff]
    %v1816 = vld [vmem:[#allocation11 + $0x158] sm:$0xff]
    %v1817 = vld [vmem:[#allocation11 + $0x160] sm:$0xff]
    %v1818 = vld [vmem:[#allocation11 + $0x168] sm:$0xff]
    %v1819 = vld [vmem:[#allocation11 + $0x170] sm:$0xff]
    %v1820 = vld [vmem:[#allocation11 + $0x178] sm:$0xff]
    %v1821 = vld [vmem:[#allocation11 + $0x180] sm:$0xff]
    %v1822 = vld [vmem:[#allocation11 + $0x188] sm:$0xff]
    %v1823 = vld [vmem:[#allocation11 + $0x190] sm:$0xff]
    %v1824 = vld [vmem:[#allocation11 + $0x198] sm:$0xff]
    %v1825 = vld [vmem:[#allocation11 + $0x1a0] sm:$0xff]
    %v1826 = vld [vmem:[#allocation11 + $0x1a8] sm:$0xff]
    %v1827 = vld [vmem:[#allocation11 + $0x1b0] sm:$0xff]
    %v1828 = vld [vmem:[#allocation11 + $0x1b8] sm:$0xff]
    %v1829 = vld [vmem:[#allocation11 + $0x1c0] sm:$0xff]
    %v1830 = vld [vmem:[#allocation11 + $0x1c8] sm:$0xff]
    %v1831 = vld [vmem:[#allocation11 + $0x1d0] sm:$0xff]
    %v1832 = vld [vmem:[#allocation11 + $0x1d8] sm:$0xff]
    %v1833 = vld [vmem:[#allocation11 + $0x1e0] sm:$0xff]
    %v1834 = vld [vmem:[#allocation11 + $0x1e8] sm:$0xff]
    %v1835 = vld [vmem:[#allocation11 + $0x1f0] sm:$0xff]
    %v1836 = vld [vmem:[#allocation11 + $0x1f8] sm:$0xff]
    %v1837 = vpack.c.bf16 %v1765, %v1765
    %v1838 = vpack.c.bf16 %v1766, %v1766
    %v1839 = vpack.c.bf16 %v1767, %v1767
    %v1840 = vpack.c.bf16 %v1768, %v1768
    %v1841 = vpack.c.bf16 %v1769, %v1769
    %v1842 = vpack.c.bf16 %v1770, %v1770
    %v1843 = vpack.c.bf16 %v1771, %v1771
    %v1844 = vpack.c.bf16 %v1772, %v1772
    %v1845 = vunpack.c.l.s8.bf16 %v1773
    %v1846 = vunpack.c.l.s8.bf16 %v1774
    %v1847 = vunpack.c.h.s8.bf16 %v1773
    %v1848 = vunpack.c.h.s8.bf16 %v1774
    %v1849 = vunpack.c.l.s8.bf16 %v1775
    %v1850 = vunpack.c.l.s8.bf16 %v1776
    %v1851 = vunpack.c.h.s8.bf16 %v1775
    %v1852 = vunpack.c.h.s8.bf16 %v1776
    %v1853 = vunpack.c.l.s8.bf16 %v1777
    %v1854 = vunpack.c.l.s8.bf16 %v1778
    %v1855 = vunpack.c.h.s8.bf16 %v1777
    %v1856 = vunpack.c.h.s8.bf16 %v1778
    %v1857 = vunpack.c.l.s8.bf16 %v1779
    %v1858 = vunpack.c.l.s8.bf16 %v1780
    %v1859 = vunpack.c.h.s8.bf16 %v1779
    %v1860 = vunpack.c.h.s8.bf16 %v1780
    %v1861 = vunpack.c.l.s8.bf16 %v1781
    %v1862 = vunpack.c.l.s8.bf16 %v1782
    %v1863 = vunpack.c.h.s8.bf16 %v1781
    %v1864 = vunpack.c.h.s8.bf16 %v1782
    %v1865 = vunpack.c.l.s8.bf16 %v1783
    %v1866 = vunpack.c.l.s8.bf16 %v1784
    %v1867 = vunpack.c.h.s8.bf16 %v1783
    %v1868 = vunpack.c.h.s8.bf16 %v1784
    %v1869 = vunpack.c.l.s8.bf16 %v1785
    %v1870 = vunpack.c.l.s8.bf16 %v1786
    %v1871 = vunpack.c.h.s8.bf16 %v1785
    %v1872 = vunpack.c.h.s8.bf16 %v1786
    %v1873 = vunpack.c.l.s8.bf16 %v1787
    %v1874 = vunpack.c.l.s8.bf16 %v1788
    %v1875 = vunpack.c.h.s8.bf16 %v1787
    %v1876 = vunpack.c.h.s8.bf16 %v1788
    %v1877 = vunpack.c.l.s8.bf16 %v1789
    %v1878 = vunpack.c.l.s8.bf16 %v1790
    %v1879 = vunpack.c.h.s8.bf16 %v1789
    %v1880 = vunpack.c.h.s8.bf16 %v1790
    %v1881 = vunpack.c.l.s8.bf16 %v1791
    %v1882 = vunpack.c.l.s8.bf16 %v1792
    %v1883 = vunpack.c.h.s8.bf16 %v1791
    %v1884 = vunpack.c.h.s8.bf16 %v1792
    %v1885 = vunpack.c.l.s8.bf16 %v1793
    %v1886 = vunpack.c.l.s8.bf16 %v1794
    %v1887 = vunpack.c.h.s8.bf16 %v1793
    %v1888 = vunpack.c.h.s8.bf16 %v1794
    %v1889 = vunpack.c.l.s8.bf16 %v1795
    %v1890 = vunpack.c.l.s8.bf16 %v1796
    %v1891 = vunpack.c.h.s8.bf16 %v1795
    %v1892 = vunpack.c.h.s8.bf16 %v1796
    %v1893 = vunpack.c.l.s8.bf16 %v1797
    %v1894 = vunpack.c.l.s8.bf16 %v1798
    %v1895 = vunpack.c.h.s8.bf16 %v1797
    %v1896 = vunpack.c.h.s8.bf16 %v1798
    %v1897 = vunpack.c.l.s8.bf16 %v1799
    %v1898 = vunpack.c.l.s8.bf16 %v1800
    %v1899 = vunpack.c.h.s8.bf16 %v1799
    %v1900 = vunpack.c.h.s8.bf16 %v1800
    %v1901 = vunpack.c.l.s8.bf16 %v1801
    %v1902 = vunpack.c.l.s8.bf16 %v1802
    %v1903 = vunpack.c.h.s8.bf16 %v1801
    %v1904 = vunpack.c.h.s8.bf16 %v1802
    %v1905 = vunpack.c.l.s8.bf16 %v1803
    %v1906 = vunpack.c.l.s8.bf16 %v1804
    %v1907 = vunpack.c.h.s8.bf16 %v1803
    %v1908 = vunpack.c.h.s8.bf16 %v1804
    %v1909 = vunpack.c.l.s8.bf16 %v1805
    %v1910 = vunpack.c.l.s8.bf16 %v1806
    %v1911 = vunpack.c.h.s8.bf16 %v1805
    %v1912 = vunpack.c.h.s8.bf16 %v1806
    %v1913 = vunpack.c.l.s8.bf16 %v1807
    %v1914 = vunpack.c.l.s8.bf16 %v1808
    %v1915 = vunpack.c.h.s8.bf16 %v1807
    %v1916 = vunpack.c.h.s8.bf16 %v1808
    %v1917 = vunpack.c.l.s8.bf16 %v1809
    %v1918 = vunpack.c.l.s8.bf16 %v1810
    %v1919 = vunpack.c.h.s8.bf16 %v1809
    %v1920 = vunpack.c.h.s8.bf16 %v1810
    %v1921 = vunpack.c.l.s8.bf16 %v1811
    %v1922 = vunpack.c.l.s8.bf16 %v1812
    %v1923 = vunpack.c.h.s8.bf16 %v1811
    %v1924 = vunpack.c.h.s8.bf16 %v1812
    %v1925 = vunpack.c.l.s8.bf16 %v1813
    %v1926 = vunpack.c.l.s8.bf16 %v1814
    %v1927 = vunpack.c.h.s8.bf16 %v1813
    %v1928 = vunpack.c.h.s8.bf16 %v1814
    %v1929 = vunpack.c.l.s8.bf16 %v1815
    %v1930 = vunpack.c.l.s8.bf16 %v1816
    %v1931 = vunpack.c.h.s8.bf16 %v1815
    %v1932 = vunpack.c.h.s8.bf16 %v1816
    %v1933 = vunpack.c.l.s8.bf16 %v1817
    %v1934 = vunpack.c.l.s8.bf16 %v1818
    %v1935 = vunpack.c.h.s8.bf16 %v1817
    %v1936 = vunpack.c.h.s8.bf16 %v1818
    %v1937 = vunpack.c.l.s8.bf16 %v1819
    %v1938 = vunpack.c.l.s8.bf16 %v1820
    %v1939 = vunpack.c.h.s8.bf16 %v1819
    %v1940 = vunpack.c.h.s8.bf16 %v1820
    %v1941 = vunpack.c.l.s8.bf16 %v1821
    %v1942 = vunpack.c.l.s8.bf16 %v1822
    %v1943 = vunpack.c.h.s8.bf16 %v1821
    %v1944 = vunpack.c.h.s8.bf16 %v1822
    %v1945 = vunpack.c.l.s8.bf16 %v1823
    %v1946 = vunpack.c.l.s8.bf16 %v1824
    %v1947 = vunpack.c.h.s8.bf16 %v1823
    %v1948 = vunpack.c.h.s8.bf16 %v1824
    %v1949 = vunpack.c.l.s8.bf16 %v1825
    %v1950 = vunpack.c.l.s8.bf16 %v1826
    %v1951 = vunpack.c.h.s8.bf16 %v1825
    %v1952 = vunpack.c.h.s8.bf16 %v1826
    %v1953 = vunpack.c.l.s8.bf16 %v1827
    %v1954 = vunpack.c.l.s8.bf16 %v1828
    %v1955 = vunpack.c.h.s8.bf16 %v1827
    %v1956 = vunpack.c.h.s8.bf16 %v1828
    %v1957 = vunpack.c.l.s8.bf16 %v1829
    %v1958 = vunpack.c.l.s8.bf16 %v1830
    %v1959 = vunpack.c.h.s8.bf16 %v1829
    %v1960 = vunpack.c.h.s8.bf16 %v1830
    %v1961 = vunpack.c.l.s8.bf16 %v1831
    %v1962 = vunpack.c.l.s8.bf16 %v1832
    %v1963 = vunpack.c.h.s8.bf16 %v1831
    %v1964 = vunpack.c.h.s8.bf16 %v1832
    %v1965 = vunpack.c.l.s8.bf16 %v1833
    %v1966 = vunpack.c.l.s8.bf16 %v1834
    %v1967 = vunpack.c.h.s8.bf16 %v1833
    %v1968 = vunpack.c.h.s8.bf16 %v1834
    %v1969 = vunpack.c.l.s8.bf16 %v1835
    %v1970 = vunpack.c.l.s8.bf16 %v1836
    %v1971 = vunpack.c.h.s8.bf16 %v1835
    %v1972 = vunpack.c.h.s8.bf16 %v1836
    %1973 = vmatprep.subr.bf16.mxu0 %v1846
    %1974 = vmatpush1.bf16.msra.mxu0 %v1845
    %1975 = vmatprep.subr.bf16.mxu0 %v1848
    %1976 = vmatpush1.bf16.msra.mxu0 %v1847
    %1977 = vmatprep.subr.bf16.mxu0 %v1850
    %1978 = vmatpush1.bf16.msra.mxu0 %v1849
    %1979 = vmatprep.subr.bf16.mxu0 %v1852
    %1980 = vmatpush1.bf16.msra.mxu0 %v1851
    %1981 = vmatprep.subr.bf16.mxu0 %v1854
    %1982 = vmatpush1.bf16.msra.mxu0 %v1853
    %1983 = vmatprep.subr.bf16.mxu0 %v1856
    %1984 = vmatpush1.bf16.msra.mxu0 %v1855
    %1985 = vmatprep.subr.bf16.mxu0 %v1858
    %1986 = vmatpush1.bf16.msra.mxu0 %v1857
    %1987 = vmatprep.subr.bf16.mxu0 %v1860
    %1988 = vmatpush1.bf16.msra.mxu0 %v1859
    %1989 = vmatprep.subr.bf16.mxu0 %v1862
    %1990 = vmatpush1.bf16.msra.mxu0 %v1861
    %1991 = vmatprep.subr.bf16.mxu0 %v1864
    %1992 = vmatpush1.bf16.msra.mxu0 %v1863
    %1993 = vmatprep.subr.bf16.mxu0 %v1866
    %1994 = vmatpush1.bf16.msra.mxu0 %v1865
    %1995 = vmatprep.subr.bf16.mxu0 %v1868
    %1996 = vmatpush1.bf16.msra.mxu0 %v1867
    %1997 = vmatprep.subr.bf16.mxu0 %v1870
    %1998 = vmatpush1.bf16.msra.mxu0 %v1869
    %1999 = vmatprep.subr.bf16.mxu0 %v1872
    %2000 = vmatpush1.bf16.msra.mxu0 %v1871
    %2001 = vmatprep.subr.bf16.mxu0 %v1874
    %2002 = vmatpush1.bf16.msra.mxu0 %v1873
    %2003 = vmatprep.subr.bf16.mxu0 %v1876
    %2004 = vmatpush1.bf16.msra.mxu0 %v1875
    %2005 = vmatprep.mubr.bf16.mxu0 %v1838
    %2006 = vmatmul.mubr.bf16.gmra.mrb[0].mxu0 %v1837
    %v2007 = vpop.f32.mrb[0].mxu0
    %v2008 = vadd.f32 0.0, %v2007
    %v2009 = vpop.f32.mrb[0].mxu0
    %v2010 = vadd.f32 0.0, %v2009
    %v2011 = vpop.f32.mrb[0].mxu0
    %v2012 = vpop.f32.mrb[0].mxu0
    %2013 = vdwg.mxu0
    %2014 = vmatprep.subr.bf16.mxu0 %v1878
    %2015 = vmatpush1.bf16.msra.mxu0 %v1877
    %2016 = vmatprep.subr.bf16.mxu0 %v1880
    %2017 = vmatpush1.bf16.msra.mxu0 %v1879
    %2018 = vmatprep.subr.bf16.mxu0 %v1882
    %2019 = vmatpush1.bf16.msra.mxu0 %v1881
    %2020 = vmatprep.subr.bf16.mxu0 %v1884
    %2021 = vmatpush1.bf16.msra.mxu0 %v1883
    %2022 = vmatprep.subr.bf16.mxu0 %v1886
    %2023 = vmatpush1.bf16.msra.mxu0 %v1885
    %2024 = vmatprep.subr.bf16.mxu0 %v1888
    %2025 = vmatpush1.bf16.msra.mxu0 %v1887
    %2026 = vmatprep.subr.bf16.mxu0 %v1890
    %2027 = vmatpush1.bf16.msra.mxu0 %v1889
    %2028 = vmatprep.subr.bf16.mxu0 %v1892
    %2029 = vmatpush1.bf16.msra.mxu0 %v1891
    %2030 = vmatprep.subr.bf16.mxu0 %v1894
    %2031 = vmatpush1.bf16.msra.mxu0 %v1893
    %2032 = vmatprep.subr.bf16.mxu0 %v1896
    %2033 = vmatpush1.bf16.msra.mxu0 %v1895
    %2034 = vmatprep.subr.bf16.mxu0 %v1898
    %2035 = vmatpush1.bf16.msra.mxu0 %v1897
    %2036 = vmatprep.subr.bf16.mxu0 %v1900
    %2037 = vmatpush1.bf16.msra.mxu0 %v1899
    %2038 = vmatprep.subr.bf16.mxu0 %v1902
    %2039 = vmatpush1.bf16.msra.mxu0 %v1901
    %2040 = vmatprep.subr.bf16.mxu0 %v1904
    %2041 = vmatpush1.bf16.msra.mxu0 %v1903
    %2042 = vmatprep.subr.bf16.mxu0 %v1906
    %2043 = vmatpush1.bf16.msra.mxu0 %v1905
    %2044 = vmatprep.subr.bf16.mxu0 %v1908
    %2045 = vmatpush1.bf16.msra.mxu0 %v1907
    %2046 = vmatprep.mubr.bf16.mxu0 %v1840
    %2047 = vmatmul.mubr.bf16.gmra.mrb[0].mxu0 %v1839
    %v2048 = vpop.f32.mrb[0].mxu0
    %v2049 = vadd.f32 %v2008, %v2048
    %v2050 = vpop.f32.mrb[0].mxu0
    %v2051 = vadd.f32 %v2010, %v2050
    %v2052 = vpop.f32.mrb[0].mxu0
    %v2053 = vpop.f32.mrb[0].mxu0
    %2054 = vdwg.mxu0
    %2055 = vmatprep.subr.bf16.mxu0 %v1910
    %2056 = vmatpush1.bf16.msra.mxu0 %v1909
    %2057 = vmatprep.subr.bf16.mxu0 %v1912
    %2058 = vmatpush1.bf16.msra.mxu0 %v1911
    %2059 = vmatprep.subr.bf16.mxu0 %v1914
    %2060 = vmatpush1.bf16.msra.mxu0 %v1913
    %2061 = vmatprep.subr.bf16.mxu0 %v1916
    %2062 = vmatpush1.bf16.msra.mxu0 %v1915
    %2063 = vmatprep.subr.bf16.mxu0 %v1918
    %2064 = vmatpush1.bf16.msra.mxu0 %v1917
    %2065 = vmatprep.subr.bf16.mxu0 %v1920
    %2066 = vmatpush1.bf16.msra.mxu0 %v1919
    %2067 = vmatprep.subr.bf16.mxu0 %v1922
    %2068 = vmatpush1.bf16.msra.mxu0 %v1921
    %2069 = vmatprep.subr.bf16.mxu0 %v1924
    %2070 = vmatpush1.bf16.msra.mxu0 %v1923
    %2071 = vmatprep.subr.bf16.mxu0 %v1926
    %2072 = vmatpush1.bf16.msra.mxu0 %v1925
    %2073 = vmatprep.subr.bf16.mxu0 %v1928
    %2074 = vmatpush1.bf16.msra.mxu0 %v1927
    %2075 = vmatprep.subr.bf16.mxu0 %v1930
    %2076 = vmatpush1.bf16.msra.mxu0 %v1929
    %2077 = vmatprep.subr.bf16.mxu0 %v1932
    %2078 = vmatpush1.bf16.msra.mxu0 %v1931
    %2079 = vmatprep.subr.bf16.mxu0 %v1934
    %2080 = vmatpush1.bf16.msra.mxu0 %v1933
    %2081 = vmatprep.subr.bf16.mxu0 %v1936
    %2082 = vmatpush1.bf16.msra.mxu0 %v1935
    %2083 = vmatprep.subr.bf16.mxu0 %v1938
    %2084 = vmatpush1.bf16.msra.mxu0 %v1937
    %2085 = vmatprep.subr.bf16.mxu0 %v1940
    %2086 = vmatpush1.bf16.msra.mxu0 %v1939
    %2087 = vmatprep.mubr.bf16.mxu0 %v1842
    %2088 = vmatmul.mubr.bf16.gmra.mrb[0].mxu0 %v1841
    %v2089 = vpop.f32.mrb[0].mxu0
    %v2090 = vadd.f32 %v2049, %v2089
    %v2091 = vpop.f32.mrb[0].mxu0
    %v2092 = vadd.f32 %v2051, %v2091
    %v2093 = vpop.f32.mrb[0].mxu0
    %v2094 = vpop.f32.mrb[0].mxu0
    %2095 = vdwg.mxu0
    %2096 = vmatprep.subr.bf16.mxu0 %v1942
    %2097 = vmatpush1.bf16.msra.mxu0 %v1941
    %2098 = vmatprep.subr.bf16.mxu0 %v1944
    %2099 = vmatpush1.bf16.msra.mxu0 %v1943
    %2100 = vmatprep.subr.bf16.mxu0 %v1946
    %2101 = vmatpush1.bf16.msra.mxu0 %v1945
    %2102 = vmatprep.subr.bf16.mxu0 %v1948
    %2103 = vmatpush1.bf16.msra.mxu0 %v1947
    %2104 = vmatprep.subr.bf16.mxu0 %v1950
    %2105 = vmatpush1.bf16.msra.mxu0 %v1949
    %2106 = vmatprep.subr.bf16.mxu0 %v1952
    %2107 = vmatpush1.bf16.msra.mxu0 %v1951
    %2108 = vmatprep.subr.bf16.mxu0 %v1954
    %2109 = vmatpush1.bf16.msra.mxu0 %v1953
    %2110 = vmatprep.subr.bf16.mxu0 %v1956
    %2111 = vmatpush1.bf16.msra.mxu0 %v1955
    %2112 = vmatprep.subr.bf16.mxu0 %v1958
    %2113 = vmatpush1.bf16.msra.mxu0 %v1957
    %2114 = vmatprep.subr.bf16.mxu0 %v1960
    %2115 = vmatpush1.bf16.msra.mxu0 %v1959
    %2116 = vmatprep.subr.bf16.mxu0 %v1962
    %2117 = vmatpush1.bf16.msra.mxu0 %v1961
    %2118 = vmatprep.subr.bf16.mxu0 %v1964
    %2119 = vmatpush1.bf16.msra.mxu0 %v1963
    %2120 = vmatprep.subr.bf16.mxu0 %v1966
    %2121 = vmatpush1.bf16.msra.mxu0 %v1965
    %2122 = vmatprep.subr.bf16.mxu0 %v1968
    %2123 = vmatpush1.bf16.msra.mxu0 %v1967
    %2124 = vmatprep.subr.bf16.mxu0 %v1970
    %2125 = vmatpush1.bf16.msra.mxu0 %v1969
    %2126 = vmatprep.subr.bf16.mxu0 %v1972
    %2127 = vmatpush1.bf16.msra.mxu0 %v1971
    %2128 = vmatprep.mubr.bf16.mxu0 %v1844
    %2129 = vmatmul.mubr.bf16.gmra.mrb[0].mxu0 %v1843
    %v2130 = vpop.f32.mrb[0].mxu0
    %v2131 = vadd.f32 %v2090, %v2130
    %v2132 = vpop.f32.mrb[0].mxu0
    %v2133 = vadd.f32 %v2092, %v2132
    %v2134 = vpop.f32.mrb[0].mxu0
    %v2135 = vpop.f32.mrb[0].mxu0
    %2136 = vdwg.mxu0
    %v2137 = vld [vmem:[#allocation13 + $0x2d] sm:$0x3]
    %v2139 = vlaneseq
    %v2140 = vshrl.u32 %v2139, 7
    %v2141 = vsub.s32 0, %v2140
    %v2142 = vrot.slane %v2137, %v2141
    %v2143 = vlaneseq
    %v2144 = vshrl.u32 %v2143, 7
    %v2145 = vsub.s32 1, %v2144
    %v2146 = vrot.slane %v2137, %v2145
    %v2149 = vmul.f32 %v2131, %v2142
    %v2150 = vmul.f32 %v2133, %v2146
    %v2151 = vld [vmem:[#allocation13 + $0x1] sm:$0x3]
    %v2153 = vlaneseq
    %v2154 = vshrl.u32 %v2153, 7
    %v2155 = vsub.s32 0, %v2154
    %v2156 = vrot.slane %v2151, %v2155
    %v2157 = vlaneseq
    %v2158 = vshrl.u32 %v2157, 7
    %v2159 = vsub.s32 1, %v2158
    %v2160 = vrot.slane %v2151, %v2159
    %v2163 = vadd.f32 %v2149, %v2156
    %v2164 = vadd.f32 %v2150, %v2160
    %v2165 = vtanh.pop %v2163
    %v2166 = vtanh.pop %v2164
    %2167 = vst [vmem:[#allocation14] sm:$0xff] %v2165
    %2168 = vst [vmem:[#allocation14 + $0x8] sm:$0xff] %v2166
    // Predicated region
    $region58: #{tpu_custom_call.1} parent=1 // pred_check
      _
    $region59: #{tpu_custom_call.1} parent=1 // pred_check_branch
      %2170 = sbr.rel (0) target = $region61
    $region60: #{tpu_custom_call.1} parent=1 // pred_region
      %s2172 = ssub.s32 256, 256
      %2173 = vsyncadd [#allocation4], %s2172
      %s2175 = sshll.u32 [#allocation14], 4
      %s2176 = int_to_ptr.vmem [resolvable:$true] %s2175
      %2178 = dma.vmem_to_hbm [thread:$0]  %s2176, 256, %s7, [#allocation4]
    $region61: #{tpu_custom_call.1} parent=1 // pred_fallthru
      _
    // Predicated region
    $region62: #{tpu_custom_call.1} parent=1 // pred_check
      _
    $region63: #{tpu_custom_call.1} parent=1 // pred_check_branch
      %2180 = sbr.rel (0) target = $region65
    $region64: #{tpu_custom_call.1} parent=1 // pred_region
      %2181 = dma.done [#allocation4], 256
    $region65: #{tpu_custom_call.1} parent=1 // pred_fallthru
      _
    %2182 = vsyncpa [#allocation3], 1
    %2183 = vsyncpa [#allocation6], 1
    %2184 = vsyncpa [#allocation9], 1
    %2185 = vsyncpa [#allocation12], 1
    %2186 = vsyncpa [#allocation4], 1

</llo_original>
